<compile_context>
chip_gen: v7x
topology: tpu7x:2x2x1
jax: 0.10.0
libtpu: 0.0.40
codegen_flags: <defaults>
</compile_context>

<pallas_src>
import functools

import numpy as np
import jax
import jax.numpy as jnp
from jax.experimental import pallas as pl
from jax.experimental.pallas import tpu as pltpu


W1_DIM = 512      # the `w1 = 512` global in the PyTorch module
_LANE = 128


def _round_up(n, m):
    return ((n + m - 1) // m) * m


def _cdiv(a, b):
    return -(-a // b)


def _vmem_capacity_bytes():
    try:
        return int(pltpu.get_tpu_info().vmem_capacity_bytes)
    except Exception:
        return 64 << 20   # conservative (v7x-sized) fallback


def _mlp_kernel(x_ref,
                w1_ref, b1_ref,
                w2_ref, b2_ref,
                w3_ref, b3_ref,
                w4_ref, b4_ref,
                noise_ref,
                out_ref, l_ref,
                *, compute_dtype):
    # x tile: (TILE_B, Dp); already compute_dtype when the wrapper padded it,
    # so the astype below is a no-op in that case.
    x = x_ref[...].astype(compute_dtype)

    # l1 + relu  -> (TILE_B, 512); MXU in compute_dtype, f32 accumulate
    h1 = jnp.dot(x, w1_ref[...],
                 preferred_element_type=jnp.float32) + b1_ref[...]
    h1 = jnp.maximum(h1, 0.0)

    # l2 + tanh  -> (TILE_B, BOTp)  (bias inside tanh; tanh runs on the EUP)
    z = jnp.dot(h1.astype(compute_dtype), w2_ref[...],
                preferred_element_type=jnp.float32) + b2_ref[...]
    z = jnp.tanh(z)

    # additive batch-invariant Gaussian noise: l = z + sqrt(var)*eps  (f32)
    l = z + noise_ref[...]
    l_ref[...] = l

    # l3 + relu  -> (TILE_B, 512)
    h3 = jnp.dot(l.astype(compute_dtype), w3_ref[...],
                 preferred_element_type=jnp.float32) + b3_ref[...]
    h3 = jnp.maximum(h3, 0.0)

    # l4 (no activation) -> (TILE_B, Dp)
    out_ref[...] = jnp.dot(h3.astype(compute_dtype), w4_ref[...],
                           preferred_element_type=jnp.float32) + b4_ref[...]


def make_params(key, input_dim, bottle_dim, seq):
    """Deterministic parameter init; shapes mirror the nn.Linear layers,
    stored as (in, out) so the kernel computes y = x @ W + b."""
    D = input_dim * seq
    dims = [(D, W1_DIM), (W1_DIM, bottle_dim), (bottle_dim, W1_DIM), (W1_DIM, D)]
    params = {}
    for i, (fan_in, fan_out) in enumerate(dims, start=1):
        key, kw, kb = jax.random.split(key, 3)
        bound = 1.0 / np.sqrt(fan_in)
        params[f"w{i}"] = jax.random.uniform(
            kw, (fan_in, fan_out), jnp.float32, -bound, bound)
        params[f"b{i}"] = jax.random.uniform(
            kb, (1, fan_out), jnp.float32, -bound, bound)
    return params


def prepare_params(params, *, input_dim, bottle_dim, seq,
                   compute_dtype=jnp.bfloat16):
    """One-time (outside-jit) padding of weights/biases to lane-dense shapes
    (multiples of 128) and casting of the weight matrices to compute_dtype.
    Biases stay f32 (added after the f32 MXU accumulation)."""
    D = input_dim * seq
    Dp = _round_up(D, _LANE)
    BOTp = _round_up(bottle_dim, _LANE)

    def pad2(a, rows, cols, dtype):
        a = jnp.asarray(a)
        if a.shape == (rows, cols) and a.dtype == jnp.dtype(dtype):
            return a
        return jnp.zeros((rows, cols), dtype).at[:a.shape[0], :a.shape[1]].set(
            a.astype(dtype))

    return {
        "w1": pad2(params["w1"], Dp, W1_DIM, compute_dtype),
        "b1": pad2(params["b1"], 1, W1_DIM, jnp.float32),
        "w2": pad2(params["w2"], W1_DIM, BOTp, compute_dtype),
        "b2": pad2(params["b2"], 1, BOTp, jnp.float32),   # padded lanes: tanh(0)=0
        "w3": pad2(params["w3"], BOTp, W1_DIM, compute_dtype),
        "b3": pad2(params["b3"], 1, W1_DIM, jnp.float32),
        "w4": pad2(params["w4"], W1_DIM, Dp, compute_dtype),
        "b4": pad2(params["b4"], 1, Dp, jnp.float32),
    }


def neural_network4_forward(x, padded_params, noise, *,
                            input_dim, bottle_dim, seq,
                            tile_b=512, single_buffer_weights=True):
    """x: (B, seq, input_dim) -> (x_out: (B, seq, input_dim) f32,
                                  l:     (B, 1, bottle_dim)  f32)

    `padded_params` must come from prepare_params(); the matmul compute dtype
    is inferred from padded_params["w1"].dtype (bf16 by default).
    """
    B = x.shape[0]
    D = input_dim * seq
    Dp = _round_up(D, _LANE)             # lane-dense feature dim
    BOTp = _round_up(bottle_dim, _LANE)  # lane-dense bottleneck dim

    w1 = padded_params["w1"]
    assert w1.shape == (Dp, W1_DIM), "padded_params do not match model dims"
    compute_dtype = jnp.dtype(w1.dtype)
    c_item = compute_dtype.itemsize
    sub = 8 * max(1, 4 // c_item)        # sublane packing: 8 (f32), 16 (bf16)

    # ---- VMEM budget (generation-aware: ~48 MiB on v7x, ~96 MiB on v5e/v6e) ----
    vmem_budget = (_vmem_capacity_bytes() * 3) // 4
    wbuf = 1 if single_buffer_weights else 2

    def vmem_bytes(tb):
        weights = c_item * (Dp * W1_DIM + W1_DIM * BOTp + BOTp * W1_DIM + W1_DIM * Dp)
        small = 4 * (2 * W1_DIM + 2 * BOTp + Dp + BOTp)   # b1..b4 + noise (f32)
        resident = wbuf * weights + 2 * small
        streamed = 2 * tb * (4 * Dp + 4 * Dp + 4 * BOTp)  # x/out/l, double-buffered (worst case f32 x)
        interm = 4 * tb * (2 * W1_DIM + 2 * BOTp + Dp)    # h1, z/l, h3, y live in f32
        return resident + streamed + interm

    # ---- batch tile: near-divisor of B; >=2 grid steps whenever the batch
    #      allows, so the "parallel" axis actually uses both v7x TensorCores ----
    min_tiles = 2 if B > sub else 1
    n_tiles = max(min_tiles, _cdiv(B, max(sub, tile_b)))
    TILE_B = _round_up(_cdiv(B, n_tiles), sub)
    while TILE_B > sub and vmem_bytes(TILE_B) > vmem_budget:
        TILE_B = _round_up(_cdiv(TILE_B, 2), sub)
    n_tiles = max(min_tiles, _cdiv(B, TILE_B))
    Bp = n_tiles * TILE_B
    # TODO(synk): for very large D (weights alone near the VMEM budget), add a
    # feature-dim grid axis tiling w1 rows / w4 columns instead of keeping the
    # full weights resident.

    # ---- x: pad only when needed; padded copy is written in compute_dtype so
    # the kernel streams half the bytes (bf16 default).  On the aligned fast
    # path x is streamed as-is (casting here would add an extra HBM pass;
    # callers wanting the bf16-DMA win should pass bf16 x directly). ----
    x_flat = x.reshape(B, D)
    if (Bp, Dp) == (B, D):
        x_p = x_flat
    else:
        x_p = jnp.zeros((Bp, Dp), compute_dtype).at[:B, :D].set(
            x_flat.astype(compute_dtype))

    if noise.shape == (1, BOTp):
        noise_p = noise.astype(jnp.float32)
    else:
        noise_p = jnp.zeros((1, BOTp), jnp.float32).at[:, :bottle_dim].set(
            noise.reshape(1, bottle_dim).astype(jnp.float32))

    x_item = jnp.dtype(x_p.dtype).itemsize
    cost = pl.CostEstimate(
        flops=2 * Bp * (Dp * W1_DIM + W1_DIM * BOTp + BOTp * W1_DIM + W1_DIM * Dp),
        transcendentals=Bp * BOTp,
        bytes_accessed=(x_item * Bp * Dp + 4 * Bp * (Dp + BOTp)
                        + c_item * 2 * (Dp * W1_DIM + W1_DIM * BOTp)
                        + 4 * (2 * W1_DIM + 2 * BOTp + Dp + BOTp)),
    )

    if single_buffer_weights:
        def const_spec(shape):
            # constant index_map -> same block every grid step; single-buffer it
            return pl.BlockSpec(shape, lambda i: (0, 0),
                                pipeline_mode=pl.Buffered(1))
    else:
        def const_spec(shape):
            return pl.BlockSpec(shape, lambda i: (0, 0))

    kernel = functools.partial(_mlp_kernel, compute_dtype=compute_dtype)

    out_p, l_p = pl.pallas_call(
        kernel,
        out_shape=(
            jax.ShapeDtypeStruct((Bp, Dp), jnp.float32),
            jax.ShapeDtypeStruct((Bp, BOTp), jnp.float32),
        ),
        grid=(n_tiles,),
        in_specs=[
            pl.BlockSpec((TILE_B, Dp), lambda i: (i, 0)),   # x: batch-tiled
            const_spec((Dp, W1_DIM)),                       # w1 (VMEM-resident)
            const_spec((1, W1_DIM)),                        # b1
            const_spec((W1_DIM, BOTp)),                     # w2
            const_spec((1, BOTp)),                          # b2
            const_spec((BOTp, W1_DIM)),                     # w3
            const_spec((1, W1_DIM)),                        # b3
            const_spec((W1_DIM, Dp)),                       # w4
            const_spec((1, Dp)),                            # b4
            const_spec((1, BOTp)),                          # noise
        ],
        out_specs=(
            pl.BlockSpec((TILE_B, Dp), lambda i: (i, 0)),   # reconstruction
            pl.BlockSpec((TILE_B, BOTp), lambda i: (i, 0)), # latent l
        ),
        compiler_params=pltpu.CompilerParams(
            dimension_semantics=("parallel",),              # megacore on v7x
            vmem_limit_bytes=int(min(vmem_budget,
                                     max(32 << 20, 2 * vmem_bytes(TILE_B)))),
        ),
        cost_estimate=cost,
    )(x_p,
      padded_params["w1"], padded_params["b1"],
      padded_params["w2"], padded_params["b2"],
      padded_params["w3"], padded_params["b3"],
      padded_params["w4"], padded_params["b4"],
      noise_p)

    x_out = out_p if (Bp, Dp) == (B, D) else out_p[:B, :D]
    x_out = x_out.reshape(B, seq, input_dim)
    l = l_p if (Bp, BOTp) == (B, bottle_dim) else l_p[:B, :bottle_dim]
    l = l.reshape(B, 1, bottle_dim)
    # TODO(synk): inject_l_hat=True path (replacing l with an external l_hat) not wired; default False.
    return x_out, l


def _reference_forward(x, params, noise, *, input_dim, bottle_dim, seq):
    """Pure-JAX f32 reference of the PyTorch forward for correctness checks."""
    B = x.shape[0]
    D = input_dim * seq
    xf = x.reshape(B, D)
    h1 = jax.nn.relu(xf @ params["w1"] + params["b1"])
    z = jnp.tanh(h1 @ params["w2"] + params["b2"])
    l = z + noise
    h3 = jax.nn.relu(l @ params["w3"] + params["b3"])
    y = h3 @ params["w4"] + params["b4"]
    return y.reshape(B, seq, input_dim), l.reshape(B, 1, bottle_dim)


if __name__ == "__main__":
    # Small shapes consistent with the module's forward.
    input_dim = 4
    seq = 8
    bottle_dim = 8
    noise_var = 0.0          # matches the PyTorch default
    batch = 2

    key = jax.random.PRNGKey(0)
    key, kx, kn, kp = jax.random.split(key, 4)

    x = jax.random.normal(kx, (batch, seq, input_dim), jnp.float32)
    params = make_params(kp, input_dim, bottle_dim, seq)
    # l = z + sqrt(noise_var) * randn(1, bottle_dim)  (batch-invariant, as in torch)
    noise = np.sqrt(noise_var) * jax.random.normal(kn, (1, bottle_dim), jnp.float32)

    x_ref, l_ref = _reference_forward(
        x, params, noise, input_dim=input_dim, bottle_dim=bottle_dim, seq=seq)

    fwd = jax.jit(
        neural_network4_forward,
        static_argnames=("input_dim", "bottle_dim", "seq", "tile_b",
                         "single_buffer_weights"),
    )

    # --- default bf16-matmul path; weights padded/cast once at init ---
    params_bf16 = prepare_params(params, input_dim=input_dim,
                                 bottle_dim=bottle_dim, seq=seq,
                                 compute_dtype=jnp.bfloat16)
    single_buffer = True
    try:
        x_out, l = fwd(x, params_bf16, noise, input_dim=input_dim,
                       bottle_dim=bottle_dim, seq=seq,
                       single_buffer_weights=True)
        jax.block_until_ready((x_out, l))
    except Exception:
        # Installed Pallas rejected pipeline_mode=pl.Buffered(1); fall back to
        # the default double-buffered constant blocks.
        single_buffer = False
        x_out, l = fwd(x, params_bf16, noise, input_dim=input_dim,
                       bottle_dim=bottle_dim, seq=seq,
                       single_buffer_weights=False)
        jax.block_until_ready((x_out, l))

    assert x_out.shape == (batch, seq, input_dim)
    assert l.shape == (batch, 1, bottle_dim)
    # bf16 matmul inputs/weights -> looser tolerance vs the f32 reference.
    np.testing.assert_allclose(np.asarray(x_out), np.asarray(x_ref),
                               atol=5e-2, rtol=5e-2)
    np.testing.assert_allclose(np.asarray(l), np.asarray(l_ref),
                               atol=5e-2, rtol=5e-2)

    # --- f32 path: tight check against the reference ---
    params_f32 = prepare_params(params, input_dim=input_dim,
                                bottle_dim=bottle_dim, seq=seq,
                                compute_dtype=jnp.float32)
    x_out32, l32 = fwd(x, params_f32, noise, input_dim=input_dim,
                       bottle_dim=bottle_dim, seq=seq,
                       single_buffer_weights=single_buffer)
    jax.block_until_ready((x_out32, l32))
    np.testing.assert_allclose(np.asarray(x_out32), np.asarray(x_ref),
                               atol=2e-5, rtol=2e-5)
    np.testing.assert_allclose(np.asarray(l32), np.asarray(l_ref),
                               atol=2e-5, rtol=2e-5)

    print("KERNEL_OK")
</pallas_src>

<mosaic_0001>
module attributes {stable_mosaic.version = 11 : i64} {
  func.func @_mlp_kernel(%arg0: i32, %arg1: memref<16x128xbf16, #tpu.memory_space<vmem>>, %arg2: memref<128x512xbf16, #tpu.memory_space<vmem>>, %arg3: memref<1x512xf32, #tpu.memory_space<vmem>>, %arg4: memref<512x128xbf16, #tpu.memory_space<vmem>>, %arg5: memref<1x128xf32, #tpu.memory_space<vmem>>, %arg6: memref<128x512xbf16, #tpu.memory_space<vmem>>, %arg7: memref<1x512xf32, #tpu.memory_space<vmem>>, %arg8: memref<512x128xbf16, #tpu.memory_space<vmem>>, %arg9: memref<1x128xf32, #tpu.memory_space<vmem>>, %arg10: memref<1x128xf32, #tpu.memory_space<vmem>>, %arg11: memref<16x128xf32, #tpu.memory_space<vmem>>, %arg12: memref<16x128xf32, #tpu.memory_space<vmem>>) attributes {dimension_semantics = [#tpu.dimension_semantics<parallel>], iteration_bounds = array<i64: 1>, scalar_prefetch = 0 : i64, scratch_operands = 0 : i64, tpu.core_type = #tpu.core_type<tc>, window_params = [{transform_indices = @transform_0, window_bounds = array<i64: 16, 128>}, {pipeline_mode = #tpu.pipeline_mode<synchronous>, transform_indices = @transform_1, window_bounds = array<i64: 128, 512>}, {pipeline_mode = #tpu.pipeline_mode<synchronous>, transform_indices = @transform_2, window_bounds = array<i64: 1, 512>}, {pipeline_mode = #tpu.pipeline_mode<synchronous>, transform_indices = @transform_3, window_bounds = array<i64: 512, 128>}, {pipeline_mode = #tpu.pipeline_mode<synchronous>, transform_indices = @transform_4, window_bounds = array<i64: 1, 128>}, {pipeline_mode = #tpu.pipeline_mode<synchronous>, transform_indices = @transform_5, window_bounds = array<i64: 128, 512>}, {pipeline_mode = #tpu.pipeline_mode<synchronous>, transform_indices = @transform_6, window_bounds = array<i64: 1, 512>}, {pipeline_mode = #tpu.pipeline_mode<synchronous>, transform_indices = @transform_7, window_bounds = array<i64: 512, 128>}, {pipeline_mode = #tpu.pipeline_mode<synchronous>, transform_indices = @transform_8, window_bounds = array<i64: 1, 128>}, {pipeline_mode = #tpu.pipeline_mode<synchronous>, transform_indices = @transform_9, window_bounds = array<i64: 1, 128>}, {transform_indices = @transform_10, window_bounds = array<i64: 16, 128>}, {transform_indices = @transform_11, window_bounds = array<i64: 16, 128>}]} {
    %c0 = arith.constant 0 : index
    %c0_0 = arith.constant 0 : index
    %0 = vector.load %arg1[%c0, %c0_0] : memref<16x128xbf16, #tpu.memory_space<vmem>>, vector<16x128xbf16>
    %c0_1 = arith.constant 0 : index
    %c0_2 = arith.constant 0 : index
    %1 = vector.load %arg2[%c0_1, %c0_2] : memref<128x512xbf16, #tpu.memory_space<vmem>>, vector<128x512xbf16>
    %cst = arith.constant dense<0.000000e+00> : vector<16x512xf32>
    %2 = tpu.matmul %0, %1, %cst {dimension_numbers = #tpu.dot_dimension_numbers<[1], [0], [0], [1], [0, 0, 1, 1], [], []>} : vector<16x128xbf16>, vector<128x512xbf16>, vector<16x512xf32> -> vector<16x512xf32>
    %c0_3 = arith.constant 0 : index
    %c0_4 = arith.constant 0 : index
    %3 = vector.load %arg3[%c0_3, %c0_4] : memref<1x512xf32, #tpu.memory_space<vmem>>, vector<1x512xf32>
    %4 = vector.broadcast %3 : vector<1x512xf32> to vector<16x512xf32>
    %5 = arith.addf %2, %4 : vector<16x512xf32>
    %cst_5 = arith.constant 0.000000e+00 : f32
    %6 = vector.broadcast %cst_5 : f32 to vector<16x512xf32>
    %7 = arith.maximumf %5, %6 : vector<16x512xf32>
    %8 = arith.truncf %7 : vector<16x512xf32> to vector<16x512xbf16>
    %c0_6 = arith.constant 0 : index
    %c0_7 = arith.constant 0 : index
    %9 = vector.load %arg4[%c0_6, %c0_7] : memref<512x128xbf16, #tpu.memory_space<vmem>>, vector<512x128xbf16>
    %cst_8 = arith.constant dense<0.000000e+00> : vector<16x128xf32>
    %10 = tpu.matmul %8, %9, %cst_8 {dimension_numbers = #tpu.dot_dimension_numbers<[1], [0], [0], [1], [0, 0, 1, 1], [], []>} : vector<16x512xbf16>, vector<512x128xbf16>, vector<16x128xf32> -> vector<16x128xf32>
    %c0_9 = arith.constant 0 : index
    %c0_10 = arith.constant 0 : index
    %11 = vector.load %arg5[%c0_9, %c0_10] : memref<1x128xf32, #tpu.memory_space<vmem>>, vector<1x128xf32>
    %12 = vector.broadcast %11 : vector<1x128xf32> to vector<16x128xf32>
    %13 = arith.addf %10, %12 : vector<16x128xf32>
    %14 = math.tanh %13 : vector<16x128xf32>
    %c0_11 = arith.constant 0 : index
    %c0_12 = arith.constant 0 : index
    %15 = vector.load %arg10[%c0_11, %c0_12] : memref<1x128xf32, #tpu.memory_space<vmem>>, vector<1x128xf32>
    %16 = vector.broadcast %15 : vector<1x128xf32> to vector<16x128xf32>
    %17 = arith.addf %14, %16 : vector<16x128xf32>
    %c0_13 = arith.constant 0 : index
    %c0_14 = arith.constant 0 : index
    %18 = vector.load %arg12[%c0_13, %c0_14] : memref<16x128xf32, #tpu.memory_space<vmem>>, vector<16x128xf32>
    tpu.vector_store %arg12[%c0_13, %c0_14], %17 {strides = array<i32>} : memref<16x128xf32, #tpu.memory_space<vmem>>, vector<16x128xf32>,
    %19 = arith.truncf %17 : vector<16x128xf32> to vector<16x128xbf16>
    %c0_15 = arith.constant 0 : index
    %c0_16 = arith.constant 0 : index
    %20 = vector.load %arg6[%c0_15, %c0_16] : memref<128x512xbf16, #tpu.memory_space<vmem>>, vector<128x512xbf16>
    %cst_17 = arith.constant dense<0.000000e+00> : vector<16x512xf32>
    %21 = tpu.matmul %19, %20, %cst_17 {dimension_numbers = #tpu.dot_dimension_numbers<[1], [0], [0], [1], [0, 0, 1, 1], [], []>} : vector<16x128xbf16>, vector<128x512xbf16>, vector<16x512xf32> -> vector<16x512xf32>
    %c0_18 = arith.constant 0 : index
    %c0_19 = arith.constant 0 : index
    %22 = vector.load %arg7[%c0_18, %c0_19] : memref<1x512xf32, #tpu.memory_space<vmem>>, vector<1x512xf32>
    %23 = vector.broadcast %22 : vector<1x512xf32> to vector<16x512xf32>
    %24 = arith.addf %21, %23 : vector<16x512xf32>
    %cst_20 = arith.constant 0.000000e+00 : f32
    %25 = vector.broadcast %cst_20 : f32 to vector<16x512xf32>
    %26 = arith.maximumf %24, %25 : vector<16x512xf32>
    %27 = arith.truncf %26 : vector<16x512xf32> to vector<16x512xbf16>
    %c0_21 = arith.constant 0 : index
    %c0_22 = arith.constant 0 : index
    %28 = vector.load %arg8[%c0_21, %c0_22] : memref<512x128xbf16, #tpu.memory_space<vmem>>, vector<512x128xbf16>
    %cst_23 = arith.constant dense<0.000000e+00> : vector<16x128xf32>
    %29 = tpu.matmul %27, %28, %cst_23 {dimension_numbers = #tpu.dot_dimension_numbers<[1], [0], [0], [1], [0, 0, 1, 1], [], []>} : vector<16x512xbf16>, vector<512x128xbf16>, vector<16x128xf32> -> vector<16x128xf32>
    %c0_24 = arith.constant 0 : index
    %c0_25 = arith.constant 0 : index
    %30 = vector.load %arg9[%c0_24, %c0_25] : memref<1x128xf32, #tpu.memory_space<vmem>>, vector<1x128xf32>
    %31 = vector.broadcast %30 : vector<1x128xf32> to vector<16x128xf32>
    %32 = arith.addf %29, %31 : vector<16x128xf32>
    %c0_26 = arith.constant 0 : index
    %c0_27 = arith.constant 0 : index
    %33 = vector.load %arg11[%c0_26, %c0_27] : memref<16x128xf32, #tpu.memory_space<vmem>>, vector<16x128xf32>
    tpu.vector_store %arg11[%c0_26, %c0_27], %32 {strides = array<i32>} : memref<16x128xf32, #tpu.memory_space<vmem>>, vector<16x128xf32>,
    return
  }
  func.func @transform_0(%arg0: i32) -> (i32, i32) {
    %c0_i32 = arith.constant 0 : i32
    %c0_i32_0 = arith.constant 0 : i32
    return %arg0, %c0_i32 : i32, i32
  }
  func.func @transform_1(%arg0: i32) -> (i32, i32) {
    %c0_i32 = arith.constant 0 : i32
    %c0_i32_0 = arith.constant 0 : i32
    %c0_i32_1 = arith.constant 0 : i32
    return %c0_i32, %c0_i32_0 : i32, i32
  }
  func.func @transform_2(%arg0: i32) -> (i32, i32) {
    %c0_i32 = arith.constant 0 : i32
    %c0_i32_0 = arith.constant 0 : i32
    %c0_i32_1 = arith.constant 0 : i32
    return %c0_i32, %c0_i32_0 : i32, i32
  }
  func.func @transform_3(%arg0: i32) -> (i32, i32) {
    %c0_i32 = arith.constant 0 : i32
    %c0_i32_0 = arith.constant 0 : i32
    %c0_i32_1 = arith.constant 0 : i32
    return %c0_i32, %c0_i32_0 : i32, i32
  }
  func.func @transform_4(%arg0: i32) -> (i32, i32) {
    %c0_i32 = arith.constant 0 : i32
    %c0_i32_0 = arith.constant 0 : i32
    %c0_i32_1 = arith.constant 0 : i32
    return %c0_i32, %c0_i32_0 : i32, i32
  }
  func.func @transform_5(%arg0: i32) -> (i32, i32) {
    %c0_i32 = arith.constant 0 : i32
    %c0_i32_0 = arith.constant 0 : i32
    %c0_i32_1 = arith.constant 0 : i32
    return %c0_i32, %c0_i32_0 : i32, i32
  }
  func.func @transform_6(%arg0: i32) -> (i32, i32) {
    %c0_i32 = arith.constant 0 : i32
    %c0_i32_0 = arith.constant 0 : i32
    %c0_i32_1 = arith.constant 0 : i32
    return %c0_i32, %c0_i32_0 : i32, i32
  }
  func.func @transform_7(%arg0: i32) -> (i32, i32) {
    %c0_i32 = arith.constant 0 : i32
    %c0_i32_0 = arith.constant 0 : i32
    %c0_i32_1 = arith.constant 0 : i32
    return %c0_i32, %c0_i32_0 : i32, i32
  }
  func.func @transform_8(%arg0: i32) -> (i32, i32) {
    %c0_i32 = arith.constant 0 : i32
    %c0_i32_0 = arith.constant 0 : i32
    %c0_i32_1 = arith.constant 0 : i32
    return %c0_i32, %c0_i32_0 : i32, i32
  }
  func.func @transform_9(%arg0: i32) -> (i32, i32) {
    %c0_i32 = arith.constant 0 : i32
    %c0_i32_0 = arith.constant 0 : i32
    %c0_i32_1 = arith.constant 0 : i32
    return %c0_i32, %c0_i32_0 : i32, i32
  }
  func.func @transform_10(%arg0: i32) -> (i32, i32) {
    %c0_i32 = arith.constant 0 : i32
    %c0_i32_0 = arith.constant 0 : i32
    return %arg0, %c0_i32 : i32, i32
  }
  func.func @transform_11(%arg0: i32) -> (i32, i32) {
    %c0_i32 = arith.constant 0 : i32
    %c0_i32_0 = arith.constant 0 : i32
    return %arg0, %c0_i32 : i32, i32
  }
}

module attributes {stable_mosaic.version = 11 : i64} {
  func.func @_mlp_kernel(%arg0: i32, %arg1: memref<16x128xbf16, #tpu.memory_space<vmem>>, %arg2: memref<128x512xbf16, #tpu.memory_space<vmem>>, %arg3: memref<1x512xf32, #tpu.memory_space<vmem>>, %arg4: memref<512x128xbf16, #tpu.memory_space<vmem>>, %arg5: memref<1x128xf32, #tpu.memory_space<vmem>>, %arg6: memref<128x512xbf16, #tpu.memory_space<vmem>>, %arg7: memref<1x512xf32, #tpu.memory_space<vmem>>, %arg8: memref<512x128xbf16, #tpu.memory_space<vmem>>, %arg9: memref<1x128xf32, #tpu.memory_space<vmem>>, %arg10: memref<1x128xf32, #tpu.memory_space<vmem>>, %arg11: memref<16x128xf32, #tpu.memory_space<vmem>>, %arg12: memref<16x128xf32, #tpu.memory_space<vmem>>) attributes {dimension_semantics = [#tpu.dimension_semantics<parallel>], iteration_bounds = array<i64: 1>, scalar_prefetch = 0 : i64, scratch_operands = 0 : i64, tpu.core_type = #tpu.core_type<tc>, window_params = [{transform_indices = @transform_0, window_bounds = array<i64: 16, 128>}, {pipeline_mode = #tpu.pipeline_mode<synchronous>, transform_indices = @transform_1, window_bounds = array<i64: 128, 512>}, {pipeline_mode = #tpu.pipeline_mode<synchronous>, transform_indices = @transform_2, window_bounds = array<i64: 1, 512>}, {pipeline_mode = #tpu.pipeline_mode<synchronous>, transform_indices = @transform_3, window_bounds = array<i64: 512, 128>}, {pipeline_mode = #tpu.pipeline_mode<synchronous>, transform_indices = @transform_4, window_bounds = array<i64: 1, 128>}, {pipeline_mode = #tpu.pipeline_mode<synchronous>, transform_indices = @transform_5, window_bounds = array<i64: 128, 512>}, {pipeline_mode = #tpu.pipeline_mode<synchronous>, transform_indices = @transform_6, window_bounds = array<i64: 1, 512>}, {pipeline_mode = #tpu.pipeline_mode<synchronous>, transform_indices = @transform_7, window_bounds = array<i64: 512, 128>}, {pipeline_mode = #tpu.pipeline_mode<synchronous>, transform_indices = @transform_8, window_bounds = array<i64: 1, 128>}, {pipeline_mode = #tpu.pipeline_mode<synchronous>, transform_indices = @transform_9, window_bounds = array<i64: 1, 128>}, {transform_indices = @transform_10, window_bounds = array<i64: 16, 128>}, {transform_indices = @transform_11, window_bounds = array<i64: 16, 128>}]} {
    %c0 = arith.constant 0 : index
    %c0_0 = arith.constant 0 : index
    %0 = vector.load %arg1[%c0, %c0_0] : memref<16x128xbf16, #tpu.memory_space<vmem>>, vector<16x128xbf16>
    %c0_1 = arith.constant 0 : index
    %c0_2 = arith.constant 0 : index
    %1 = vector.load %arg2[%c0_1, %c0_2] : memref<128x512xbf16, #tpu.memory_space<vmem>>, vector<128x512xbf16>
    %cst = arith.constant dense<0.000000e+00> : vector<16x512xf32>
    %2 = tpu.matmul %0, %1, %cst {dimension_numbers = #tpu.dot_dimension_numbers<[1], [0], [0], [1], [0, 0, 1, 1], [], []>} : vector<16x128xbf16>, vector<128x512xbf16>, vector<16x512xf32> -> vector<16x512xf32>
    %c0_3 = arith.constant 0 : index
    %c0_4 = arith.constant 0 : index
    %3 = vector.load %arg3[%c0_3, %c0_4] : memref<1x512xf32, #tpu.memory_space<vmem>>, vector<1x512xf32>
    %4 = vector.broadcast %3 : vector<1x512xf32> to vector<16x512xf32>
    %5 = arith.addf %2, %4 : vector<16x512xf32>
    %cst_5 = arith.constant 0.000000e+00 : f32
    %6 = vector.broadcast %cst_5 : f32 to vector<16x512xf32>
    %7 = arith.maximumf %5, %6 : vector<16x512xf32>
    %8 = arith.truncf %7 : vector<16x512xf32> to vector<16x512xbf16>
    %c0_6 = arith.constant 0 : index
    %c0_7 = arith.constant 0 : index
    %9 = vector.load %arg4[%c0_6, %c0_7] : memref<512x128xbf16, #tpu.memory_space<vmem>>, vector<512x128xbf16>
    %cst_8 = arith.constant dense<0.000000e+00> : vector<16x128xf32>
    %10 = tpu.matmul %8, %9, %cst_8 {dimension_numbers = #tpu.dot_dimension_numbers<[1], [0], [0], [1], [0, 0, 1, 1], [], []>} : vector<16x512xbf16>, vector<512x128xbf16>, vector<16x128xf32> -> vector<16x128xf32>
    %c0_9 = arith.constant 0 : index
    %c0_10 = arith.constant 0 : index
    %11 = vector.load %arg5[%c0_9, %c0_10] : memref<1x128xf32, #tpu.memory_space<vmem>>, vector<1x128xf32>
    %12 = vector.broadcast %11 : vector<1x128xf32> to vector<16x128xf32>
    %13 = arith.addf %10, %12 : vector<16x128xf32>
    %14 = math.tanh %13 : vector<16x128xf32>
    %c0_11 = arith.constant 0 : index
    %c0_12 = arith.constant 0 : index
    %15 = vector.load %arg10[%c0_11, %c0_12] : memref<1x128xf32, #tpu.memory_space<vmem>>, vector<1x128xf32>
    %16 = vector.broadcast %15 : vector<1x128xf32> to vector<16x128xf32>
    %17 = arith.addf %14, %16 : vector<16x128xf32>
    %c0_13 = arith.constant 0 : index
    %c0_14 = arith.constant 0 : index
    %18 = vector.load %arg12[%c0_13, %c0_14] : memref<16x128xf32, #tpu.memory_space<vmem>>, vector<16x128xf32>
    tpu.vector_store %arg12[%c0_13, %c0_14], %17 {strides = array<i32>} : memref<16x128xf32, #tpu.memory_space<vmem>>, vector<16x128xf32>,
    %19 = arith.truncf %17 : vector<16x128xf32> to vector<16x128xbf16>
    %c0_15 = arith.constant 0 : index
    %c0_16 = arith.constant 0 : index
    %20 = vector.load %arg6[%c0_15, %c0_16] : memref<128x512xbf16, #tpu.memory_space<vmem>>, vector<128x512xbf16>
    %cst_17 = arith.constant dense<0.000000e+00> : vector<16x512xf32>
    %21 = tpu.matmul %19, %20, %cst_17 {dimension_numbers = #tpu.dot_dimension_numbers<[1], [0], [0], [1], [0, 0, 1, 1], [], []>} : vector<16x128xbf16>, vector<128x512xbf16>, vector<16x512xf32> -> vector<16x512xf32>
    %c0_18 = arith.constant 0 : index
    %c0_19 = arith.constant 0 : index
    %22 = vector.load %arg7[%c0_18, %c0_19] : memref<1x512xf32, #tpu.memory_space<vmem>>, vector<1x512xf32>
    %23 = vector.broadcast %22 : vector<1x512xf32> to vector<16x512xf32>
    %24 = arith.addf %21, %23 : vector<16x512xf32>
    %cst_20 = arith.constant 0.000000e+00 : f32
    %25 = vector.broadcast %cst_20 : f32 to vector<16x512xf32>
    %26 = arith.maximumf %24, %25 : vector<16x512xf32>
    %27 = arith.truncf %26 : vector<16x512xf32> to vector<16x512xbf16>
    %c0_21 = arith.constant 0 : index
    %c0_22 = arith.constant 0 : index
    %28 = vector.load %arg8[%c0_21, %c0_22] : memref<512x128xbf16, #tpu.memory_space<vmem>>, vector<512x128xbf16>
    %cst_23 = arith.constant dense<0.000000e+00> : vector<16x128xf32>
    %29 = tpu.matmul %27, %28, %cst_23 {dimension_numbers = #tpu.dot_dimension_numbers<[1], [0], [0], [1], [0, 0, 1, 1], [], []>} : vector<16x512xbf16>, vector<512x128xbf16>, vector<16x128xf32> -> vector<16x128xf32>
    %c0_24 = arith.constant 0 : index
    %c0_25 = arith.constant 0 : index
    %30 = vector.load %arg9[%c0_24, %c0_25] : memref<1x128xf32, #tpu.memory_space<vmem>>, vector<1x128xf32>
    %31 = vector.broadcast %30 : vector<1x128xf32> to vector<16x128xf32>
    %32 = arith.addf %29, %31 : vector<16x128xf32>
    %c0_26 = arith.constant 0 : index
    %c0_27 = arith.constant 0 : index
    %33 = vector.load %arg11[%c0_26, %c0_27] : memref<16x128xf32, #tpu.memory_space<vmem>>, vector<16x128xf32>
    tpu.vector_store %arg11[%c0_26, %c0_27], %32 {strides = array<i32>} : memref<16x128xf32, #tpu.memory_space<vmem>>, vector<16x128xf32>,
    return
  }
  func.func @transform_0(%arg0: i32) -> (i32, i32) {
    %c0_i32 = arith.constant 0 : i32
    %c0_i32_0 = arith.constant 0 : i32
    return %arg0, %c0_i32 : i32, i32
  }
  func.func @transform_1(%arg0: i32) -> (i32, i32) {
    %c0_i32 = arith.constant 0 : i32
    %c0_i32_0 = arith.constant 0 : i32
    %c0_i32_1 = arith.constant 0 : i32
    return %c0_i32, %c0_i32_0 : i32, i32
  }
  func.func @transform_2(%arg0: i32) -> (i32, i32) {
    %c0_i32 = arith.constant 0 : i32
    %c0_i32_0 = arith.constant 0 : i32
    %c0_i32_1 = arith.constant 0 : i32
    return %c0_i32, %c0_i32_0 : i32, i32
  }
  func.func @transform_3(%arg0: i32) -> (i32, i32) {
    %c0_i32 = arith.constant 0 : i32
    %c0_i32_0 = arith.constant 0 : i32
    %c0_i32_1 = arith.constant 0 : i32
    return %c0_i32, %c0_i32_0 : i32, i32
  }
  func.func @transform_4(%arg0: i32) -> (i32, i32) {
    %c0_i32 = arith.constant 0 : i32
    %c0_i32_0 = arith.constant 0 : i32
    %c0_i32_1 = arith.constant 0 : i32
    return %c0_i32, %c0_i32_0 : i32, i32
  }
  func.func @transform_5(%arg0: i32) -> (i32, i32) {
    %c0_i32 = arith.constant 0 : i32
    %c0_i32_0 = arith.constant 0 : i32
    %c0_i32_1 = arith.constant 0 : i32
    return %c0_i32, %c0_i32_0 : i32, i32
  }
  func.func @transform_6(%arg0: i32) -> (i32, i32) {
    %c0_i32 = arith.constant 0 : i32
    %c0_i32_0 = arith.constant 0 : i32
    %c0_i32_1 = arith.constant 0 : i32
    return %c0_i32, %c0_i32_0 : i32, i32
  }
  func.func @transform_7(%arg0: i32) -> (i32, i32) {
    %c0_i32 = arith.constant 0 : i32
    %c0_i32_0 = arith.constant 0 : i32
    %c0_i32_1 = arith.constant 0 : i32
    return %c0_i32, %c0_i32_0 : i32, i32
  }
  func.func @transform_8(%arg0: i32) -> (i32, i32) {
    %c0_i32 = arith.constant 0 : i32
    %c0_i32_0 = arith.constant 0 : i32
    %c0_i32_1 = arith.constant 0 : i32
    return %c0_i32, %c0_i32_0 : i32, i32
  }
  func.func @transform_9(%arg0: i32) -> (i32, i32) {
    %c0_i32 = arith.constant 0 : i32
    %c0_i32_0 = arith.constant 0 : i32
    %c0_i32_1 = arith.constant 0 : i32
    return %c0_i32, %c0_i32_0 : i32, i32
  }
  func.func @transform_10(%arg0: i32) -> (i32, i32) {
    %c0_i32 = arith.constant 0 : i32
    %c0_i32_0 = arith.constant 0 : i32
    return %arg0, %c0_i32 : i32, i32
  }
  func.func @transform_11(%arg0: i32) -> (i32, i32) {
    %c0_i32 = arith.constant 0 : i32
    %c0_i32_0 = arith.constant 0 : i32
    return %arg0, %c0_i32 : i32, i32
  }
}

</mosaic_0001>

<llo_original>
// kernel: neural_network4_forward.1
$region0: #{neural_network4_forward.1}
  #allocation0 [shape = 'u32[]', space=smem, size = 0x4, offset = 0x4, fixed_abs, tag = 'smem constant byte address 0x4 - core index']
  #allocation1 [shape = 'u32[144,128]{1,0:T(1,128)}', space=vmem, size = 0x12000, scoped, tag = 'internal scratch']
  %s0 = inlined_call_operand.vmem [shape: bf16[16,128], index: 0, kind: input, shape index: {}]
  %s1 = inlined_call_operand.hbm [shape: bf16[128,512], index: 1, kind: input, shape index: {}]
  %s2 = inlined_call_operand.vmem [shape: f32[1,512], index: 2, kind: input, shape index: {}]
  %s3 = inlined_call_operand.hbm [shape: bf16[512,128], index: 3, kind: input, shape index: {}]
  %s4 = inlined_call_operand.vmem [shape: f32[1,128], index: 4, kind: input, shape index: {}]
  %s5 = inlined_call_operand.hbm [shape: bf16[128,512], index: 5, kind: input, shape index: {}]
  %s6 = inlined_call_operand.vmem [shape: f32[1,512], index: 6, kind: input, shape index: {}]
  %s7 = inlined_call_operand.hbm [shape: bf16[512,128], index: 7, kind: input, shape index: {}]
  %s8 = inlined_call_operand.vmem [shape: f32[1,128], index: 8, kind: input, shape index: {}]
  %s9 = inlined_call_operand.vmem [shape: f32[1,128], index: 9, kind: input, shape index: {}]
  %s10 = inlined_call_operand.vmem [shape: f32[16,128], index: 10, kind: output, shape index: {0}]
  %s11 = inlined_call_operand.vmem [shape: f32[16,128], index: 11, kind: output, shape index: {1}]
  %12 = xla_tuple %s10, %s11
  %s13 = sld [smem:[#allocation0]]
  $region74: #{neural_network4_forward.1} parent=0
    _
  %s15 = ssub.s32 1, %s13
  %s16 = scalar_select 0, %s15, %s13
  $region1: #{neural_network4_forward.1} parent=0
    #allocation2 [shape = 'u8[131072]{0}', space=vmem, size = 0x20000, scoped, tag = 'input window, operand 1, single buffered']
    #allocation3 [shape = 's32[1]{0}', space=sflag, size = 0x4, scoped, tag = 'scoped memory for neural_network4_forward.1']
    #allocation4 [shape = 'u8[131072]{0}', space=vmem, size = 0x20000, scoped, tag = 'input window, operand 3, single buffered']
    #allocation5 [shape = 's32[1]{0}', space=sflag, size = 0x4, scoped, tag = 'scoped memory for neural_network4_forward.1']
    #allocation6 [shape = 'u8[131072]{0}', space=vmem, size = 0x20000, scoped, tag = 'input window, operand 5, single buffered']
    #allocation7 [shape = 'u8[131072]{0}', space=vmem, size = 0x20000, scoped, tag = 'input window, operand 7, single buffered']
    #allocation8 [shape = 's32[1]{0}', space=sflag, size = 0x4, scoped, tag = 'scoped memory for neural_network4_forward.1']
    %17 = vsyncpa [#allocation3], 0
    %18 = vsyncpa [#allocation5], 0
    %19 = vsyncpa [#allocation8], 0
    // Predicated region
    $region2: #{neural_network4_forward.1} parent=1 // pred_check
      _
    $region3: #{neural_network4_forward.1} parent=1 // pred_check_branch
      %21 = sbr.rel (0) target = $region5
    $region4: #{neural_network4_forward.1} parent=1 // pred_region
      _
    $region5: #{neural_network4_forward.1} parent=1 // pred_fallthru
      _
    // Predicated region
    $region6: #{neural_network4_forward.1} parent=1 // pred_check
      _
    $region7: #{neural_network4_forward.1} parent=1 // pred_check_branch
      %23 = sbr.rel (0) target = $region9
    $region8: #{neural_network4_forward.1} parent=1 // pred_region
      %s25 = ssub.s32 4096, 4096
      %26 = vsyncadd [#allocation3], %s25
      %s27 = sshll.u32 [#allocation2], 4
      %s28 = int_to_ptr.vmem [resolvable:$true] %s27
      %33 = dma.hbm_to_vmem [thread:$0]  %s1, 4096, %s28, [#allocation3], 256, 256, 16
    $region9: #{neural_network4_forward.1} parent=1 // pred_fallthru
      _
    // Predicated region
    $region10: #{neural_network4_forward.1} parent=1 // pred_check
      _
    $region11: #{neural_network4_forward.1} parent=1 // pred_check_branch
      %35 = sbr.rel (0) target = $region13
    $region12: #{neural_network4_forward.1} parent=1 // pred_region
      _
    $region13: #{neural_network4_forward.1} parent=1 // pred_fallthru
      _
    // Predicated region
    $region14: #{neural_network4_forward.1} parent=1 // pred_check
      _
    $region15: #{neural_network4_forward.1} parent=1 // pred_check_branch
      %37 = sbr.rel (0) target = $region17
    $region16: #{neural_network4_forward.1} parent=1 // pred_region
      %s39 = ssub.s32 4096, 4096
      %40 = vsyncadd [#allocation5], %s39
      %s41 = sshll.u32 [#allocation4], 4
      %s42 = int_to_ptr.vmem [resolvable:$true] %s41
      %47 = dma.hbm_to_vmem [thread:$0]  %s3, 4096, %s42, [#allocation5], 64, 64, 4
    $region17: #{neural_network4_forward.1} parent=1 // pred_fallthru
      _
    // Predicated region
    $region18: #{neural_network4_forward.1} parent=1 // pred_check
      _
    $region19: #{neural_network4_forward.1} parent=1 // pred_check_branch
      %49 = sbr.rel (0) target = $region21
    $region20: #{neural_network4_forward.1} parent=1 // pred_region
      _
    $region21: #{neural_network4_forward.1} parent=1 // pred_fallthru
      _
    // Predicated region
    $region22: #{neural_network4_forward.1} parent=1 // pred_check
      _
    $region23: #{neural_network4_forward.1} parent=1 // pred_check_branch
      %51 = sbr.rel (0) target = $region25
    $region24: #{neural_network4_forward.1} parent=1 // pred_region
      %s53 = ssub.s32 4096, 4096
      %54 = vsyncadd [#allocation5], %s53
      %s55 = sshll.u32 [#allocation6], 4
      %s56 = int_to_ptr.vmem [resolvable:$true] %s55
      %61 = dma.hbm_to_vmem [thread:$0]  %s5, 4096, %s56, [#allocation5], 256, 256, 16
    $region25: #{neural_network4_forward.1} parent=1 // pred_fallthru
      _
    // Predicated region
    $region26: #{neural_network4_forward.1} parent=1 // pred_check
      _
    $region27: #{neural_network4_forward.1} parent=1 // pred_check_branch
      %63 = sbr.rel (0) target = $region29
    $region28: #{neural_network4_forward.1} parent=1 // pred_region
      _
    $region29: #{neural_network4_forward.1} parent=1 // pred_fallthru
      _
    // Predicated region
    $region30: #{neural_network4_forward.1} parent=1 // pred_check
      _
    $region31: #{neural_network4_forward.1} parent=1 // pred_check_branch
      %65 = sbr.rel (0) target = $region33
    $region32: #{neural_network4_forward.1} parent=1 // pred_region
      %s67 = ssub.s32 4096, 4096
      %68 = vsyncadd [#allocation8], %s67
      %s69 = sshll.u32 [#allocation7], 4
      %s70 = int_to_ptr.vmem [resolvable:$true] %s69
      %75 = dma.hbm_to_vmem [thread:$0]  %s7, 4096, %s70, [#allocation8], 64, 64, 4
    $region33: #{neural_network4_forward.1} parent=1 // pred_fallthru
      _
    // Predicated region
    $region34: #{neural_network4_forward.1} parent=1 // pred_check
      _
    $region35: #{neural_network4_forward.1} parent=1 // pred_check_branch
      %77 = sbr.rel (0) target = $region37
    $region36: #{neural_network4_forward.1} parent=1 // pred_region
      _
    $region37: #{neural_network4_forward.1} parent=1 // pred_fallthru
      _
    // Predicated region
    $region38: #{neural_network4_forward.1} parent=1 // pred_check
      _
    $region39: #{neural_network4_forward.1} parent=1 // pred_check_branch
      %79 = sbr.rel (0) target = $region41
    $region40: #{neural_network4_forward.1} parent=1 // pred_region
      _
    $region41: #{neural_network4_forward.1} parent=1 // pred_fallthru
      _
    // Predicated region
    $region42: #{neural_network4_forward.1} parent=1 // pred_check
      _
    $region43: #{neural_network4_forward.1} parent=1 // pred_check_branch
      %81 = sbr.rel (0) target = $region45
    $region44: #{neural_network4_forward.1} parent=1 // pred_region
      %82 = dma.done [#allocation3], 4096
    $region45: #{neural_network4_forward.1} parent=1 // pred_fallthru
      _
    // Predicated region
    $region46: #{neural_network4_forward.1} parent=1 // pred_check
      _
    $region47: #{neural_network4_forward.1} parent=1 // pred_check_branch
      %84 = sbr.rel (0) target = $region49
    $region48: #{neural_network4_forward.1} parent=1 // pred_region
      %85 = dma.done [#allocation5], 4096
    $region49: #{neural_network4_forward.1} parent=1 // pred_fallthru
      _
    // Predicated region
    $region50: #{neural_network4_forward.1} parent=1 // pred_check
      _
    $region51: #{neural_network4_forward.1} parent=1 // pred_check_branch
      %87 = sbr.rel (0) target = $region53
    $region52: #{neural_network4_forward.1} parent=1 // pred_region
      %88 = dma.done [#allocation5], 4096
    $region53: #{neural_network4_forward.1} parent=1 // pred_fallthru
      _
    // Predicated region
    $region54: #{neural_network4_forward.1} parent=1 // pred_check
      _
    $region55: #{neural_network4_forward.1} parent=1 // pred_check_branch
      %90 = sbr.rel (0) target = $region57
    $region56: #{neural_network4_forward.1} parent=1 // pred_region
      %91 = dma.done [#allocation8], 4096
    $region57: #{neural_network4_forward.1} parent=1 // pred_fallthru
      _
    %v93 = vld [vmem:[%s0] sm:$0xf]
    %v94 = vld [vmem:[%s0 + $0x4] sm:$0xf]
    %v95 = vld [vmem:[#allocation2] sm:$0xff]
    %v96 = vld [vmem:[#allocation2 + $0x8] sm:$0xff]
    %v97 = vld [vmem:[#allocation2 + $0x10] sm:$0xff]
    %v98 = vld [vmem:[#allocation2 + $0x18] sm:$0xff]
    %v99 = vld [vmem:[#allocation2 + $0x20] sm:$0xff]
    %v100 = vld [vmem:[#allocation2 + $0x28] sm:$0xff]
    %v101 = vld [vmem:[#allocation2 + $0x30] sm:$0xff]
    %v102 = vld [vmem:[#allocation2 + $0x38] sm:$0xff]
    %v103 = vld [vmem:[#allocation2 + $0x40] sm:$0xff]
    %v104 = vld [vmem:[#allocation2 + $0x48] sm:$0xff]
    %v105 = vld [vmem:[#allocation2 + $0x50] sm:$0xff]
    %v106 = vld [vmem:[#allocation2 + $0x58] sm:$0xff]
    %v107 = vld [vmem:[#allocation2 + $0x60] sm:$0xff]
    %v108 = vld [vmem:[#allocation2 + $0x68] sm:$0xff]
    %v109 = vld [vmem:[#allocation2 + $0x70] sm:$0xff]
    %v110 = vld [vmem:[#allocation2 + $0x78] sm:$0xff]
    %v111 = vld [vmem:[#allocation2 + $0x80] sm:$0xff]
    %v112 = vld [vmem:[#allocation2 + $0x88] sm:$0xff]
    %v113 = vld [vmem:[#allocation2 + $0x90] sm:$0xff]
    %v114 = vld [vmem:[#allocation2 + $0x98] sm:$0xff]
    %v115 = vld [vmem:[#allocation2 + $0xa0] sm:$0xff]
    %v116 = vld [vmem:[#allocation2 + $0xa8] sm:$0xff]
    %v117 = vld [vmem:[#allocation2 + $0xb0] sm:$0xff]
    %v118 = vld [vmem:[#allocation2 + $0xb8] sm:$0xff]
    %v119 = vld [vmem:[#allocation2 + $0xc0] sm:$0xff]
    %v120 = vld [vmem:[#allocation2 + $0xc8] sm:$0xff]
    %v121 = vld [vmem:[#allocation2 + $0xd0] sm:$0xff]
    %v122 = vld [vmem:[#allocation2 + $0xd8] sm:$0xff]
    %v123 = vld [vmem:[#allocation2 + $0xe0] sm:$0xff]
    %v124 = vld [vmem:[#allocation2 + $0xe8] sm:$0xff]
    %v125 = vld [vmem:[#allocation2 + $0xf0] sm:$0xff]
    %v126 = vld [vmem:[#allocation2 + $0xf8] sm:$0xff]
    %v127 = vld [vmem:[%s2] sm:$0xf]
    %v129 = vlaneseq
    %v130 = vshrl.u32 %v129, 7
    %v131 = vsub.s32 0, %v130
    %v132 = vrot.slane %v127, %v131
    %v133 = vlaneseq
    %v134 = vshrl.u32 %v133, 7
    %v135 = vsub.s32 1, %v134
    %v136 = vrot.slane %v127, %v135
    %v137 = vlaneseq
    %v138 = vshrl.u32 %v137, 7
    %v139 = vsub.s32 2, %v138
    %v140 = vrot.slane %v127, %v139
    %v141 = vlaneseq
    %v142 = vshrl.u32 %v141, 7
    %v143 = vsub.s32 3, %v142
    %v144 = vrot.slane %v127, %v143
    %v151 = vunpack.c.l.b16 %v93
    %v152 = vunpack.c.l.b16 %v94
    %v153 = vpack.c.b16 %v152, %v151
    %v187 = vunpack.c.l.b16 %v95
    %v188 = vunpack.c.h.b16 %v95
    %v189 = vunpack.c.l.b16 %v96
    %v190 = vunpack.c.h.b16 %v96
    %v191 = vunpack.c.l.b16 %v97
    %v192 = vunpack.c.h.b16 %v97
    %v193 = vunpack.c.l.b16 %v98
    %v194 = vunpack.c.h.b16 %v98
    %v195 = vunpack.c.l.b16 %v99
    %v196 = vunpack.c.h.b16 %v99
    %v197 = vunpack.c.l.b16 %v100
    %v198 = vunpack.c.h.b16 %v100
    %v199 = vunpack.c.l.b16 %v101
    %v200 = vunpack.c.h.b16 %v101
    %v201 = vunpack.c.l.b16 %v102
    %v202 = vunpack.c.h.b16 %v102
    %v203 = vunpack.c.l.b16 %v103
    %v204 = vunpack.c.h.b16 %v103
    %v205 = vunpack.c.l.b16 %v104
    %v206 = vunpack.c.h.b16 %v104
    %v207 = vunpack.c.l.b16 %v105
    %v208 = vunpack.c.h.b16 %v105
    %v209 = vunpack.c.l.b16 %v106
    %v210 = vunpack.c.h.b16 %v106
    %v211 = vunpack.c.l.b16 %v107
    %v212 = vunpack.c.h.b16 %v107
    %v213 = vunpack.c.l.b16 %v108
    %v214 = vunpack.c.h.b16 %v108
    %v215 = vunpack.c.l.b16 %v109
    %v216 = vunpack.c.h.b16 %v109
    %v217 = vunpack.c.l.b16 %v110
    %v218 = vunpack.c.h.b16 %v110
    %v219 = vunpack.c.l.b16 %v111
    %v220 = vunpack.c.h.b16 %v111
    %v221 = vunpack.c.l.b16 %v112
    %v222 = vunpack.c.h.b16 %v112
    %v223 = vunpack.c.l.b16 %v113
    %v224 = vunpack.c.h.b16 %v113
    %v225 = vunpack.c.l.b16 %v114
    %v226 = vunpack.c.h.b16 %v114
    %v227 = vunpack.c.l.b16 %v115
    %v228 = vunpack.c.h.b16 %v115
    %v229 = vunpack.c.l.b16 %v116
    %v230 = vunpack.c.h.b16 %v116
    %v231 = vunpack.c.l.b16 %v117
    %v232 = vunpack.c.h.b16 %v117
    %v233 = vunpack.c.l.b16 %v118
    %v234 = vunpack.c.h.b16 %v118
    %v235 = vunpack.c.l.b16 %v119
    %v236 = vunpack.c.h.b16 %v119
    %v237 = vunpack.c.l.b16 %v120
    %v238 = vunpack.c.h.b16 %v120
    %v239 = vunpack.c.l.b16 %v121
    %v240 = vunpack.c.h.b16 %v121
    %v241 = vunpack.c.l.b16 %v122
    %v242 = vunpack.c.h.b16 %v122
    %v243 = vunpack.c.l.b16 %v123
    %v244 = vunpack.c.h.b16 %v123
    %v245 = vunpack.c.l.b16 %v124
    %v246 = vunpack.c.h.b16 %v124
    %v247 = vunpack.c.l.b16 %v125
    %v248 = vunpack.c.h.b16 %v125
    %v249 = vunpack.c.l.b16 %v126
    %v250 = vunpack.c.h.b16 %v126
    %v251 = vpack.c.b16 %v191, %v187
    %v252 = vpack.c.b16 %v192, %v188
    %v253 = vpack.c.b16 %v193, %v189
    %v254 = vpack.c.b16 %v194, %v190
    %v255 = vpack.c.b16 %v199, %v195
    %v256 = vpack.c.b16 %v200, %v196
    %v257 = vpack.c.b16 %v201, %v197
    %v258 = vpack.c.b16 %v202, %v198
    %v259 = vpack.c.b16 %v207, %v203
    %v260 = vpack.c.b16 %v208, %v204
    %v261 = vpack.c.b16 %v209, %v205
    %v262 = vpack.c.b16 %v210, %v206
    %v263 = vpack.c.b16 %v215, %v211
    %v264 = vpack.c.b16 %v216, %v212
    %v265 = vpack.c.b16 %v217, %v213
    %v266 = vpack.c.b16 %v218, %v214
    %v267 = vpack.c.b16 %v223, %v219
    %v268 = vpack.c.b16 %v224, %v220
    %v269 = vpack.c.b16 %v225, %v221
    %v270 = vpack.c.b16 %v226, %v222
    %v271 = vpack.c.b16 %v231, %v227
    %v272 = vpack.c.b16 %v232, %v228
    %v273 = vpack.c.b16 %v233, %v229
    %v274 = vpack.c.b16 %v234, %v230
    %v275 = vpack.c.b16 %v239, %v235
    %v276 = vpack.c.b16 %v240, %v236
    %v277 = vpack.c.b16 %v241, %v237
    %v278 = vpack.c.b16 %v242, %v238
    %v279 = vpack.c.b16 %v247, %v243
    %v280 = vpack.c.b16 %v248, %v244
    %v281 = vpack.c.b16 %v249, %v245
    %v282 = vpack.c.b16 %v250, %v246
    %315 = vmatprep.subr.bf16.mxu0 %v252
    %316 = vmatpush1.bf16.msra.mxu0 %v251
    %317 = vmatprep.subr.bf16.mxu0 %v256
    %318 = vmatpush1.bf16.msra.mxu0 %v255
    %319 = vmatprep.subr.bf16.mxu0 %v260
    %320 = vmatpush1.bf16.msra.mxu0 %v259
    %321 = vmatprep.subr.bf16.mxu0 %v264
    %322 = vmatpush1.bf16.msra.mxu0 %v263
    %323 = vmatprep.subr.bf16.mxu0 %v268
    %324 = vmatpush1.bf16.msra.mxu0 %v267
    %325 = vmatprep.subr.bf16.mxu0 %v272
    %326 = vmatpush1.bf16.msra.mxu0 %v271
    %327 = vmatprep.subr.bf16.mxu0 %v276
    %328 = vmatpush1.bf16.msra.mxu0 %v275
    %329 = vmatprep.subr.bf16.mxu0 %v280
    %330 = vmatpush1.bf16.msra.mxu0 %v279
    %331 = vmatprep.subr.bf16.mxu0 0
    %332 = vmatpush1.bf16.msra.mxu0 0
    %333 = vmatprep.subr.bf16.mxu0 0
    %334 = vmatpush1.bf16.msra.mxu0 0
    %335 = vmatprep.subr.bf16.mxu0 0
    %336 = vmatpush1.bf16.msra.mxu0 0
    %337 = vmatprep.subr.bf16.mxu0 0
    %338 = vmatpush1.bf16.msra.mxu0 0
    %339 = vmatprep.subr.bf16.mxu0 0
    %340 = vmatpush1.bf16.msra.mxu0 0
    %341 = vmatprep.subr.bf16.mxu0 0
    %342 = vmatpush1.bf16.msra.mxu0 0
    %343 = vmatprep.subr.bf16.mxu0 0
    %344 = vmatpush1.bf16.msra.mxu0 0
    %345 = vmatprep.subr.bf16.mxu0 0
    %346 = vmatpush1.bf16.msra.mxu0 0
    %347 = vmatprep.mubr.bf16.mxu0 0
    %348 = vmatmul.mubr.bf16.gmra.mrb[0].mxu0 %v153
    %v349 = vpop.f32.mrb[0].mxu0
    %v350 = vadd.f32 %v132, %v349
    %v351 = vpop.f32.mrb[0].mxu0
    %v352 = vadd.f32 %v136, %v351
    %v353 = vpop.f32.mrb[0].mxu0
    %v354 = vadd.f32 %v132, %v353
    %v355 = vpop.f32.mrb[0].mxu0
    %v356 = vadd.f32 %v136, %v355
    %357 = vdwg.mxu0
    %358 = vmatprep.subr.bf16.mxu0 %v254
    %359 = vmatpush1.bf16.msra.mxu0 %v253
    %360 = vmatprep.subr.bf16.mxu0 %v258
    %361 = vmatpush1.bf16.msra.mxu0 %v257
    %362 = vmatprep.subr.bf16.mxu0 %v262
    %363 = vmatpush1.bf16.msra.mxu0 %v261
    %364 = vmatprep.subr.bf16.mxu0 %v266
    %365 = vmatpush1.bf16.msra.mxu0 %v265
    %366 = vmatprep.subr.bf16.mxu0 %v270
    %367 = vmatpush1.bf16.msra.mxu0 %v269
    %368 = vmatprep.subr.bf16.mxu0 %v274
    %369 = vmatpush1.bf16.msra.mxu0 %v273
    %370 = vmatprep.subr.bf16.mxu0 %v278
    %371 = vmatpush1.bf16.msra.mxu0 %v277
    %372 = vmatprep.subr.bf16.mxu0 %v282
    %373 = vmatpush1.bf16.msra.mxu0 %v281
    %374 = vmatprep.subr.bf16.mxu0 0
    %375 = vmatpush1.bf16.msra.mxu0 0
    %376 = vmatprep.subr.bf16.mxu0 0
    %377 = vmatpush1.bf16.msra.mxu0 0
    %378 = vmatprep.subr.bf16.mxu0 0
    %379 = vmatpush1.bf16.msra.mxu0 0
    %380 = vmatprep.subr.bf16.mxu0 0
    %381 = vmatpush1.bf16.msra.mxu0 0
    %382 = vmatprep.subr.bf16.mxu0 0
    %383 = vmatpush1.bf16.msra.mxu0 0
    %384 = vmatprep.subr.bf16.mxu0 0
    %385 = vmatpush1.bf16.msra.mxu0 0
    %386 = vmatprep.subr.bf16.mxu0 0
    %387 = vmatpush1.bf16.msra.mxu0 0
    %388 = vmatprep.subr.bf16.mxu0 0
    %389 = vmatpush1.bf16.msra.mxu0 0
    %390 = vmatprep.mubr.bf16.mxu0 0
    %391 = vmatmul.mubr.bf16.gmra.mrb[0].mxu0 %v153
    %v392 = vpop.f32.mrb[0].mxu0
    %v393 = vadd.f32 %v140, %v392
    %v394 = vpop.f32.mrb[0].mxu0
    %v395 = vadd.f32 %v144, %v394
    %v396 = vpop.f32.mrb[0].mxu0
    %v397 = vadd.f32 %v140, %v396
    %v398 = vpop.f32.mrb[0].mxu0
    %v399 = vadd.f32 %v144, %v398
    %400 = vdwg.mxu0
    %v401 = vmax.f32 %v350, 0.0
    %v402 = vmax.f32 %v352, 0.0
    %v403 = vmax.f32 %v393, 0.0
    %v404 = vmax.f32 %v395, 0.0
    %v405 = vmax.f32 %v354, 0.0
    %v406 = vmax.f32 %v356, 0.0
    %v407 = vmax.f32 %v397, 0.0
    %v408 = vmax.f32 %v399, 0.0
    %v409 = vpack.c.bf16 %v405, %v401
    %v410 = vpack.c.bf16 %v406, %v402
    %v411 = vpack.c.bf16 %v407, %v403
    %v412 = vpack.c.bf16 %v408, %v404
    %v413 = vld [vmem:[#allocation4] sm:$0xf]
    %v414 = vld [vmem:[#allocation4 + $0x4] sm:$0xf]
    %v415 = vld [vmem:[#allocation4 + $0x8] sm:$0xf]
    %v416 = vld [vmem:[#allocation4 + $0xc] sm:$0xf]
    %v417 = vld [vmem:[#allocation4 + $0x10] sm:$0xf]
    %v418 = vld [vmem:[#allocation4 + $0x14] sm:$0xf]
    %v419 = vld [vmem:[#allocation4 + $0x18] sm:$0xf]
    %v420 = vld [vmem:[#allocation4 + $0x1c] sm:$0xf]
    %v421 = vld [vmem:[#allocation4 + $0x20] sm:$0xf]
    %v422 = vld [vmem:[#allocation4 + $0x24] sm:$0xf]
    %v423 = vld [vmem:[#allocation4 + $0x28] sm:$0xf]
    %v424 = vld [vmem:[#allocation4 + $0x2c] sm:$0xf]
    %v425 = vld [vmem:[#allocation4 + $0x30] sm:$0xf]
    %v426 = vld [vmem:[#allocation4 + $0x34] sm:$0xf]
    %v427 = vld [vmem:[#allocation4 + $0x38] sm:$0xf]
    %v428 = vld [vmem:[#allocation4 + $0x3c] sm:$0xf]
    %v429 = vld [vmem:[#allocation4 + $0x40] sm:$0xf]
    %v430 = vld [vmem:[#allocation4 + $0x44] sm:$0xf]
    %v431 = vld [vmem:[#allocation4 + $0x48] sm:$0xf]
    %v432 = vld [vmem:[#allocation4 + $0x4c] sm:$0xf]
    %v433 = vld [vmem:[#allocation4 + $0x50] sm:$0xf]
    %v434 = vld [vmem:[#allocation4 + $0x54] sm:$0xf]
    %v435 = vld [vmem:[#allocation4 + $0x58] sm:$0xf]
    %v436 = vld [vmem:[#allocation4 + $0x5c] sm:$0xf]
    %v437 = vld [vmem:[#allocation4 + $0x60] sm:$0xf]
    %v438 = vld [vmem:[#allocation4 + $0x64] sm:$0xf]
    %v439 = vld [vmem:[#allocation4 + $0x68] sm:$0xf]
    %v440 = vld [vmem:[#allocation4 + $0x6c] sm:$0xf]
    %v441 = vld [vmem:[#allocation4 + $0x70] sm:$0xf]
    %v442 = vld [vmem:[#allocation4 + $0x74] sm:$0xf]
    %v443 = vld [vmem:[#allocation4 + $0x78] sm:$0xf]
    %v444 = vld [vmem:[#allocation4 + $0x7c] sm:$0xf]
    %v445 = vld [vmem:[#allocation4 + $0x80] sm:$0xf]
    %v446 = vld [vmem:[#allocation4 + $0x84] sm:$0xf]
    %v447 = vld [vmem:[#allocation4 + $0x88] sm:$0xf]
    %v448 = vld [vmem:[#allocation4 + $0x8c] sm:$0xf]
    %v449 = vld [vmem:[#allocation4 + $0x90] sm:$0xf]
    %v450 = vld [vmem:[#allocation4 + $0x94] sm:$0xf]
    %v451 = vld [vmem:[#allocation4 + $0x98] sm:$0xf]
    %v452 = vld [vmem:[#allocation4 + $0x9c] sm:$0xf]
    %v453 = vld [vmem:[#allocation4 + $0xa0] sm:$0xf]
    %v454 = vld [vmem:[#allocation4 + $0xa4] sm:$0xf]
    %v455 = vld [vmem:[#allocation4 + $0xa8] sm:$0xf]
    %v456 = vld [vmem:[#allocation4 + $0xac] sm:$0xf]
    %v457 = vld [vmem:[#allocation4 + $0xb0] sm:$0xf]
    %v458 = vld [vmem:[#allocation4 + $0xb4] sm:$0xf]
    %v459 = vld [vmem:[#allocation4 + $0xb8] sm:$0xf]
    %v460 = vld [vmem:[#allocation4 + $0xbc] sm:$0xf]
    %v461 = vld [vmem:[#allocation4 + $0xc0] sm:$0xf]
    %v462 = vld [vmem:[#allocation4 + $0xc4] sm:$0xf]
    %v463 = vld [vmem:[#allocation4 + $0xc8] sm:$0xf]
    %v464 = vld [vmem:[#allocation4 + $0xcc] sm:$0xf]
    %v465 = vld [vmem:[#allocation4 + $0xd0] sm:$0xf]
    %v466 = vld [vmem:[#allocation4 + $0xd4] sm:$0xf]
    %v467 = vld [vmem:[#allocation4 + $0xd8] sm:$0xf]
    %v468 = vld [vmem:[#allocation4 + $0xdc] sm:$0xf]
    %v469 = vld [vmem:[#allocation4 + $0xe0] sm:$0xf]
    %v470 = vld [vmem:[#allocation4 + $0xe4] sm:$0xf]
    %v471 = vld [vmem:[#allocation4 + $0xe8] sm:$0xf]
    %v472 = vld [vmem:[#allocation4 + $0xec] sm:$0xf]
    %v473 = vld [vmem:[#allocation4 + $0xf0] sm:$0xf]
    %v474 = vld [vmem:[#allocation4 + $0xf4] sm:$0xf]
    %v475 = vld [vmem:[#allocation4 + $0xf8] sm:$0xf]
    %v476 = vld [vmem:[#allocation4 + $0xfc] sm:$0xf]
    %v477 = vld [vmem:[%s4] sm:$0x1]
    %v479 = vlaneseq
    %v480 = vshrl.u32 %v479, 7
    %v481 = vsub.s32 0, %v480
    %v482 = vrot.slane %v477, %v481
    %v548 = vunpack.c.l.b16 %v413
    %v549 = vunpack.c.l.b16 %v414
    %v550 = vunpack.c.l.b16 %v415
    %v551 = vunpack.c.l.b16 %v416
    %v552 = vunpack.c.l.b16 %v417
    %v553 = vunpack.c.l.b16 %v418
    %v554 = vunpack.c.l.b16 %v419
    %v555 = vunpack.c.l.b16 %v420
    %v556 = vunpack.c.l.b16 %v421
    %v557 = vunpack.c.l.b16 %v422
    %v558 = vunpack.c.l.b16 %v423
    %v559 = vunpack.c.l.b16 %v424
    %v560 = vunpack.c.l.b16 %v425
    %v561 = vunpack.c.l.b16 %v426
    %v562 = vunpack.c.l.b16 %v427
    %v563 = vunpack.c.l.b16 %v428
    %v564 = vunpack.c.l.b16 %v429
    %v565 = vunpack.c.l.b16 %v430
    %v566 = vunpack.c.l.b16 %v431
    %v567 = vunpack.c.l.b16 %v432
    %v568 = vunpack.c.l.b16 %v433
    %v569 = vunpack.c.l.b16 %v434
    %v570 = vunpack.c.l.b16 %v435
    %v571 = vunpack.c.l.b16 %v436
    %v572 = vunpack.c.l.b16 %v437
    %v573 = vunpack.c.l.b16 %v438
    %v574 = vunpack.c.l.b16 %v439
    %v575 = vunpack.c.l.b16 %v440
    %v576 = vunpack.c.l.b16 %v441
    %v577 = vunpack.c.l.b16 %v442
    %v578 = vunpack.c.l.b16 %v443
    %v579 = vunpack.c.l.b16 %v444
    %v580 = vunpack.c.l.b16 %v445
    %v581 = vunpack.c.l.b16 %v446
    %v582 = vunpack.c.l.b16 %v447
    %v583 = vunpack.c.l.b16 %v448
    %v584 = vunpack.c.l.b16 %v449
    %v585 = vunpack.c.l.b16 %v450
    %v586 = vunpack.c.l.b16 %v451
    %v587 = vunpack.c.l.b16 %v452
    %v588 = vunpack.c.l.b16 %v453
    %v589 = vunpack.c.l.b16 %v454
    %v590 = vunpack.c.l.b16 %v455
    %v591 = vunpack.c.l.b16 %v456
    %v592 = vunpack.c.l.b16 %v457
    %v593 = vunpack.c.l.b16 %v458
    %v594 = vunpack.c.l.b16 %v459
    %v595 = vunpack.c.l.b16 %v460
    %v596 = vunpack.c.l.b16 %v461
    %v597 = vunpack.c.l.b16 %v462
    %v598 = vunpack.c.l.b16 %v463
    %v599 = vunpack.c.l.b16 %v464
    %v600 = vunpack.c.l.b16 %v465
    %v601 = vunpack.c.l.b16 %v466
    %v602 = vunpack.c.l.b16 %v467
    %v603 = vunpack.c.l.b16 %v468
    %v604 = vunpack.c.l.b16 %v469
    %v605 = vunpack.c.l.b16 %v470
    %v606 = vunpack.c.l.b16 %v471
    %v607 = vunpack.c.l.b16 %v472
    %v608 = vunpack.c.l.b16 %v473
    %v609 = vunpack.c.l.b16 %v474
    %v610 = vunpack.c.l.b16 %v475
    %v611 = vunpack.c.l.b16 %v476
    %v612 = vpack.c.b16 %v549, %v548
    %v613 = vpack.c.b16 %v551, %v550
    %v614 = vpack.c.b16 %v553, %v552
    %v615 = vpack.c.b16 %v555, %v554
    %v616 = vpack.c.b16 %v557, %v556
    %v617 = vpack.c.b16 %v559, %v558
    %v618 = vpack.c.b16 %v561, %v560
    %v619 = vpack.c.b16 %v563, %v562
    %v620 = vpack.c.b16 %v565, %v564
    %v621 = vpack.c.b16 %v567, %v566
    %v622 = vpack.c.b16 %v569, %v568
    %v623 = vpack.c.b16 %v571, %v570
    %v624 = vpack.c.b16 %v573, %v572
    %v625 = vpack.c.b16 %v575, %v574
    %v626 = vpack.c.b16 %v577, %v576
    %v627 = vpack.c.b16 %v579, %v578
    %v628 = vpack.c.b16 %v581, %v580
    %v629 = vpack.c.b16 %v583, %v582
    %v630 = vpack.c.b16 %v585, %v584
    %v631 = vpack.c.b16 %v587, %v586
    %v632 = vpack.c.b16 %v589, %v588
    %v633 = vpack.c.b16 %v591, %v590
    %v634 = vpack.c.b16 %v593, %v592
    %v635 = vpack.c.b16 %v595, %v594
    %v636 = vpack.c.b16 %v597, %v596
    %v637 = vpack.c.b16 %v599, %v598
    %v638 = vpack.c.b16 %v601, %v600
    %v639 = vpack.c.b16 %v603, %v602
    %v640 = vpack.c.b16 %v605, %v604
    %v641 = vpack.c.b16 %v607, %v606
    %v642 = vpack.c.b16 %v609, %v608
    %v643 = vpack.c.b16 %v611, %v610
    %676 = vmatprep.subr.bf16.mxu0 0
    %677 = vmatpush1.bf16.msra.mxu0 %v612
    %678 = vmatprep.subr.bf16.mxu0 0
    %679 = vmatpush1.bf16.msra.mxu0 %v613
    %680 = vmatprep.subr.bf16.mxu0 0
    %681 = vmatpush1.bf16.msra.mxu0 %v614
    %682 = vmatprep.subr.bf16.mxu0 0
    %683 = vmatpush1.bf16.msra.mxu0 %v615
    %684 = vmatprep.subr.bf16.mxu0 0
    %685 = vmatpush1.bf16.msra.mxu0 %v616
    %686 = vmatprep.subr.bf16.mxu0 0
    %687 = vmatpush1.bf16.msra.mxu0 %v617
    %688 = vmatprep.subr.bf16.mxu0 0
    %689 = vmatpush1.bf16.msra.mxu0 %v618
    %690 = vmatprep.subr.bf16.mxu0 0
    %691 = vmatpush1.bf16.msra.mxu0 %v619
    %692 = vmatprep.subr.bf16.mxu0 0
    %693 = vmatpush1.bf16.msra.mxu0 %v620
    %694 = vmatprep.subr.bf16.mxu0 0
    %695 = vmatpush1.bf16.msra.mxu0 %v621
    %696 = vmatprep.subr.bf16.mxu0 0
    %697 = vmatpush1.bf16.msra.mxu0 %v622
    %698 = vmatprep.subr.bf16.mxu0 0
    %699 = vmatpush1.bf16.msra.mxu0 %v623
    %700 = vmatprep.subr.bf16.mxu0 0
    %701 = vmatpush1.bf16.msra.mxu0 %v624
    %702 = vmatprep.subr.bf16.mxu0 0
    %703 = vmatpush1.bf16.msra.mxu0 %v625
    %704 = vmatprep.subr.bf16.mxu0 0
    %705 = vmatpush1.bf16.msra.mxu0 %v626
    %706 = vmatprep.subr.bf16.mxu0 0
    %707 = vmatpush1.bf16.msra.mxu0 %v627
    %708 = vmatprep.mubr.bf16.mxu0 %v410
    %709 = vmatmul.mubr.bf16.gmra.mrb[0].mxu0 %v409
    %v710 = vpop.f32.mrb[0].mxu0
    %v711 = vadd.f32 %v482, %v710
    %v712 = vpop.f32.mrb[0].mxu0
    %v713 = vpop.f32.mrb[0].mxu0
    %v714 = vadd.f32 %v482, %v713
    %v715 = vpop.f32.mrb[0].mxu0
    %716 = vdwg.mxu0
    %717 = vmatprep.subr.bf16.mxu0 0
    %718 = vmatpush1.bf16.msra.mxu0 %v628
    %719 = vmatprep.subr.bf16.mxu0 0
    %720 = vmatpush1.bf16.msra.mxu0 %v629
    %721 = vmatprep.subr.bf16.mxu0 0
    %722 = vmatpush1.bf16.msra.mxu0 %v630
    %723 = vmatprep.subr.bf16.mxu0 0
    %724 = vmatpush1.bf16.msra.mxu0 %v631
    %725 = vmatprep.subr.bf16.mxu0 0
    %726 = vmatpush1.bf16.msra.mxu0 %v632
    %727 = vmatprep.subr.bf16.mxu0 0
    %728 = vmatpush1.bf16.msra.mxu0 %v633
    %729 = vmatprep.subr.bf16.mxu0 0
    %730 = vmatpush1.bf16.msra.mxu0 %v634
    %731 = vmatprep.subr.bf16.mxu0 0
    %732 = vmatpush1.bf16.msra.mxu0 %v635
    %733 = vmatprep.subr.bf16.mxu0 0
    %734 = vmatpush1.bf16.msra.mxu0 %v636
    %735 = vmatprep.subr.bf16.mxu0 0
    %736 = vmatpush1.bf16.msra.mxu0 %v637
    %737 = vmatprep.subr.bf16.mxu0 0
    %738 = vmatpush1.bf16.msra.mxu0 %v638
    %739 = vmatprep.subr.bf16.mxu0 0
    %740 = vmatpush1.bf16.msra.mxu0 %v639
    %741 = vmatprep.subr.bf16.mxu0 0
    %742 = vmatpush1.bf16.msra.mxu0 %v640
    %743 = vmatprep.subr.bf16.mxu0 0
    %744 = vmatpush1.bf16.msra.mxu0 %v641
    %745 = vmatprep.subr.bf16.mxu0 0
    %746 = vmatpush1.bf16.msra.mxu0 %v642
    %747 = vmatprep.subr.bf16.mxu0 0
    %748 = vmatpush1.bf16.msra.mxu0 %v643
    %749 = vmatprep.mubr.bf16.mxu0 %v412
    %750 = vmatmul.mubr.bf16.gmra.mrb[0].mxu0 %v411
    %v751 = vpop.f32.mrb[0].mxu0
    %v752 = vadd.f32 %v711, %v751
    %v753 = vpop.f32.mrb[0].mxu0
    %v754 = vpop.f32.mrb[0].mxu0
    %v755 = vadd.f32 %v714, %v754
    %v756 = vpop.f32.mrb[0].mxu0
    %757 = vdwg.mxu0
    %v758 = vtanh.pop %v752
    %v759 = vtanh.pop %v755
    %v760 = vld [vmem:[%s9] sm:$0x1]
    %v762 = vlaneseq
    %v763 = vshrl.u32 %v762, 7
    %v764 = vsub.s32 0, %v763
    %v765 = vrot.slane %v760, %v764
    %v767 = vadd.f32 %v758, %v765
    %v768 = vadd.f32 %v759, %v765
    %769 = vst [vmem:[%s11] sm:$0xff] %v767
    %770 = vst [vmem:[%s11 + $0x8] sm:$0xff] %v768
    %v771 = vpack.c.bf16 %v768, %v767
    %v772 = vld [vmem:[#allocation6] sm:$0xff]
    %v773 = vld [vmem:[#allocation6 + $0x8] sm:$0xff]
    %v774 = vld [vmem:[#allocation6 + $0x10] sm:$0xff]
    %v775 = vld [vmem:[#allocation6 + $0x18] sm:$0xff]
    %v776 = vld [vmem:[#allocation6 + $0x20] sm:$0xff]
    %v777 = vld [vmem:[#allocation6 + $0x28] sm:$0xff]
    %v778 = vld [vmem:[#allocation6 + $0x30] sm:$0xff]
    %v779 = vld [vmem:[#allocation6 + $0x38] sm:$0xff]
    %v780 = vld [vmem:[#allocation6 + $0x40] sm:$0xff]
    %v781 = vld [vmem:[#allocation6 + $0x48] sm:$0xff]
    %v782 = vld [vmem:[#allocation6 + $0x50] sm:$0xff]
    %v783 = vld [vmem:[#allocation6 + $0x58] sm:$0xff]
    %v784 = vld [vmem:[#allocation6 + $0x60] sm:$0xff]
    %v785 = vld [vmem:[#allocation6 + $0x68] sm:$0xff]
    %v786 = vld [vmem:[#allocation6 + $0x70] sm:$0xff]
    %v787 = vld [vmem:[#allocation6 + $0x78] sm:$0xff]
    %v788 = vld [vmem:[#allocation6 + $0x80] sm:$0xff]
    %v789 = vld [vmem:[#allocation6 + $0x88] sm:$0xff]
    %v790 = vld [vmem:[#allocation6 + $0x90] sm:$0xff]
    %v791 = vld [vmem:[#allocation6 + $0x98] sm:$0xff]
    %v792 = vld [vmem:[#allocation6 + $0xa0] sm:$0xff]
    %v793 = vld [vmem:[#allocation6 + $0xa8] sm:$0xff]
    %v794 = vld [vmem:[#allocation6 + $0xb0] sm:$0xff]
    %v795 = vld [vmem:[#allocation6 + $0xb8] sm:$0xff]
    %v796 = vld [vmem:[#allocation6 + $0xc0] sm:$0xff]
    %v797 = vld [vmem:[#allocation6 + $0xc8] sm:$0xff]
    %v798 = vld [vmem:[#allocation6 + $0xd0] sm:$0xff]
    %v799 = vld [vmem:[#allocation6 + $0xd8] sm:$0xff]
    %v800 = vld [vmem:[#allocation6 + $0xe0] sm:$0xff]
    %v801 = vld [vmem:[#allocation6 + $0xe8] sm:$0xff]
    %v802 = vld [vmem:[#allocation6 + $0xf0] sm:$0xff]
    %v803 = vld [vmem:[#allocation6 + $0xf8] sm:$0xff]
    %v804 = vld [vmem:[%s6] sm:$0xf]
    %v806 = vlaneseq
    %v807 = vshrl.u32 %v806, 7
    %v808 = vsub.s32 0, %v807
    %v809 = vrot.slane %v804, %v808
    %v810 = vlaneseq
    %v811 = vshrl.u32 %v810, 7
    %v812 = vsub.s32 1, %v811
    %v813 = vrot.slane %v804, %v812
    %v814 = vlaneseq
    %v815 = vshrl.u32 %v814, 7
    %v816 = vsub.s32 2, %v815
    %v817 = vrot.slane %v804, %v816
    %v818 = vlaneseq
    %v819 = vshrl.u32 %v818, 7
    %v820 = vsub.s32 3, %v819
    %v821 = vrot.slane %v804, %v820
    %v858 = vunpack.c.l.b16 %v772
    %v859 = vunpack.c.h.b16 %v772
    %v860 = vunpack.c.l.b16 %v773
    %v861 = vunpack.c.h.b16 %v773
    %v862 = vunpack.c.l.b16 %v774
    %v863 = vunpack.c.h.b16 %v774
    %v864 = vunpack.c.l.b16 %v775
    %v865 = vunpack.c.h.b16 %v775
    %v866 = vunpack.c.l.b16 %v776
    %v867 = vunpack.c.h.b16 %v776
    %v868 = vunpack.c.l.b16 %v777
    %v869 = vunpack.c.h.b16 %v777
    %v870 = vunpack.c.l.b16 %v778
    %v871 = vunpack.c.h.b16 %v778
    %v872 = vunpack.c.l.b16 %v779
    %v873 = vunpack.c.h.b16 %v779
    %v874 = vunpack.c.l.b16 %v780
    %v875 = vunpack.c.h.b16 %v780
    %v876 = vunpack.c.l.b16 %v781
    %v877 = vunpack.c.h.b16 %v781
    %v878 = vunpack.c.l.b16 %v782
    %v879 = vunpack.c.h.b16 %v782
    %v880 = vunpack.c.l.b16 %v783
    %v881 = vunpack.c.h.b16 %v783
    %v882 = vunpack.c.l.b16 %v784
    %v883 = vunpack.c.h.b16 %v784
    %v884 = vunpack.c.l.b16 %v785
    %v885 = vunpack.c.h.b16 %v785
    %v886 = vunpack.c.l.b16 %v786
    %v887 = vunpack.c.h.b16 %v786
    %v888 = vunpack.c.l.b16 %v787
    %v889 = vunpack.c.h.b16 %v787
    %v890 = vunpack.c.l.b16 %v788
    %v891 = vunpack.c.h.b16 %v788
    %v892 = vunpack.c.l.b16 %v789
    %v893 = vunpack.c.h.b16 %v789
    %v894 = vunpack.c.l.b16 %v790
    %v895 = vunpack.c.h.b16 %v790
    %v896 = vunpack.c.l.b16 %v791
    %v897 = vunpack.c.h.b16 %v791
    %v898 = vunpack.c.l.b16 %v792
    %v899 = vunpack.c.h.b16 %v792
    %v900 = vunpack.c.l.b16 %v793
    %v901 = vunpack.c.h.b16 %v793
    %v902 = vunpack.c.l.b16 %v794
    %v903 = vunpack.c.h.b16 %v794
    %v904 = vunpack.c.l.b16 %v795
    %v905 = vunpack.c.h.b16 %v795
    %v906 = vunpack.c.l.b16 %v796
    %v907 = vunpack.c.h.b16 %v796
    %v908 = vunpack.c.l.b16 %v797
    %v909 = vunpack.c.h.b16 %v797
    %v910 = vunpack.c.l.b16 %v798
    %v911 = vunpack.c.h.b16 %v798
    %v912 = vunpack.c.l.b16 %v799
    %v913 = vunpack.c.h.b16 %v799
    %v914 = vunpack.c.l.b16 %v800
    %v915 = vunpack.c.h.b16 %v800
    %v916 = vunpack.c.l.b16 %v801
    %v917 = vunpack.c.h.b16 %v801
    %v918 = vunpack.c.l.b16 %v802
    %v919 = vunpack.c.h.b16 %v802
    %v920 = vunpack.c.l.b16 %v803
    %v921 = vunpack.c.h.b16 %v803
    %v922 = vpack.c.b16 %v862, %v858
    %v923 = vpack.c.b16 %v863, %v859
    %v924 = vpack.c.b16 %v864, %v860
    %v925 = vpack.c.b16 %v865, %v861
    %v926 = vpack.c.b16 %v870, %v866
    %v927 = vpack.c.b16 %v871, %v867
    %v928 = vpack.c.b16 %v872, %v868
    %v929 = vpack.c.b16 %v873, %v869
    %v930 = vpack.c.b16 %v878, %v874
    %v931 = vpack.c.b16 %v879, %v875
    %v932 = vpack.c.b16 %v880, %v876
    %v933 = vpack.c.b16 %v881, %v877
    %v934 = vpack.c.b16 %v886, %v882
    %v935 = vpack.c.b16 %v887, %v883
    %v936 = vpack.c.b16 %v888, %v884
    %v937 = vpack.c.b16 %v889, %v885
    %v938 = vpack.c.b16 %v894, %v890
    %v939 = vpack.c.b16 %v895, %v891
    %v940 = vpack.c.b16 %v896, %v892
    %v941 = vpack.c.b16 %v897, %v893
    %v942 = vpack.c.b16 %v902, %v898
    %v943 = vpack.c.b16 %v903, %v899
    %v944 = vpack.c.b16 %v904, %v900
    %v945 = vpack.c.b16 %v905, %v901
    %v946 = vpack.c.b16 %v910, %v906
    %v947 = vpack.c.b16 %v911, %v907
    %v948 = vpack.c.b16 %v912, %v908
    %v949 = vpack.c.b16 %v913, %v909
    %v950 = vpack.c.b16 %v918, %v914
    %v951 = vpack.c.b16 %v919, %v915
    %v952 = vpack.c.b16 %v920, %v916
    %v953 = vpack.c.b16 %v921, %v917
    %986 = vmatprep.subr.bf16.mxu0 %v923
    %987 = vmatpush1.bf16.msra.mxu0 %v922
    %988 = vmatprep.subr.bf16.mxu0 %v927
    %989 = vmatpush1.bf16.msra.mxu0 %v926
    %990 = vmatprep.subr.bf16.mxu0 %v931
    %991 = vmatpush1.bf16.msra.mxu0 %v930
    %992 = vmatprep.subr.bf16.mxu0 %v935
    %993 = vmatpush1.bf16.msra.mxu0 %v934
    %994 = vmatprep.subr.bf16.mxu0 %v939
    %995 = vmatpush1.bf16.msra.mxu0 %v938
    %996 = vmatprep.subr.bf16.mxu0 %v943
    %997 = vmatpush1.bf16.msra.mxu0 %v942
    %998 = vmatprep.subr.bf16.mxu0 %v947
    %999 = vmatpush1.bf16.msra.mxu0 %v946
    %1000 = vmatprep.subr.bf16.mxu0 %v951
    %1001 = vmatpush1.bf16.msra.mxu0 %v950
    %1002 = vmatprep.subr.bf16.mxu0 0
    %1003 = vmatpush1.bf16.msra.mxu0 0
    %1004 = vmatprep.subr.bf16.mxu0 0
    %1005 = vmatpush1.bf16.msra.mxu0 0
    %1006 = vmatprep.subr.bf16.mxu0 0
    %1007 = vmatpush1.bf16.msra.mxu0 0
    %1008 = vmatprep.subr.bf16.mxu0 0
    %1009 = vmatpush1.bf16.msra.mxu0 0
    %1010 = vmatprep.subr.bf16.mxu0 0
    %1011 = vmatpush1.bf16.msra.mxu0 0
    %1012 = vmatprep.subr.bf16.mxu0 0
    %1013 = vmatpush1.bf16.msra.mxu0 0
    %1014 = vmatprep.subr.bf16.mxu0 0
    %1015 = vmatpush1.bf16.msra.mxu0 0
    %1016 = vmatprep.subr.bf16.mxu0 0
    %1017 = vmatpush1.bf16.msra.mxu0 0
    %1018 = vmatprep.mubr.bf16.mxu0 0
    %1019 = vmatmul.mubr.bf16.gmra.mrb[0].mxu0 %v771
    %v1020 = vpop.f32.mrb[0].mxu0
    %v1021 = vadd.f32 %v809, %v1020
    %v1022 = vpop.f32.mrb[0].mxu0
    %v1023 = vadd.f32 %v813, %v1022
    %v1024 = vpop.f32.mrb[0].mxu0
    %v1025 = vadd.f32 %v809, %v1024
    %v1026 = vpop.f32.mrb[0].mxu0
    %v1027 = vadd.f32 %v813, %v1026
    %1028 = vdwg.mxu0
    %1029 = vmatprep.subr.bf16.mxu0 %v925
    %1030 = vmatpush1.bf16.msra.mxu0 %v924
    %1031 = vmatprep.subr.bf16.mxu0 %v929
    %1032 = vmatpush1.bf16.msra.mxu0 %v928
    %1033 = vmatprep.subr.bf16.mxu0 %v933
    %1034 = vmatpush1.bf16.msra.mxu0 %v932
    %1035 = vmatprep.subr.bf16.mxu0 %v937
    %1036 = vmatpush1.bf16.msra.mxu0 %v936
    %1037 = vmatprep.subr.bf16.mxu0 %v941
    %1038 = vmatpush1.bf16.msra.mxu0 %v940
    %1039 = vmatprep.subr.bf16.mxu0 %v945
    %1040 = vmatpush1.bf16.msra.mxu0 %v944
    %1041 = vmatprep.subr.bf16.mxu0 %v949
    %1042 = vmatpush1.bf16.msra.mxu0 %v948
    %1043 = vmatprep.subr.bf16.mxu0 %v953
    %1044 = vmatpush1.bf16.msra.mxu0 %v952
    %1045 = vmatprep.subr.bf16.mxu0 0
    %1046 = vmatpush1.bf16.msra.mxu0 0
    %1047 = vmatprep.subr.bf16.mxu0 0
    %1048 = vmatpush1.bf16.msra.mxu0 0
    %1049 = vmatprep.subr.bf16.mxu0 0
    %1050 = vmatpush1.bf16.msra.mxu0 0
    %1051 = vmatprep.subr.bf16.mxu0 0
    %1052 = vmatpush1.bf16.msra.mxu0 0
    %1053 = vmatprep.subr.bf16.mxu0 0
    %1054 = vmatpush1.bf16.msra.mxu0 0
    %1055 = vmatprep.subr.bf16.mxu0 0
    %1056 = vmatpush1.bf16.msra.mxu0 0
    %1057 = vmatprep.subr.bf16.mxu0 0
    %1058 = vmatpush1.bf16.msra.mxu0 0
    %1059 = vmatprep.subr.bf16.mxu0 0
    %1060 = vmatpush1.bf16.msra.mxu0 0
    %1061 = vmatprep.mubr.bf16.mxu0 0
    %1062 = vmatmul.mubr.bf16.gmra.mrb[0].mxu0 %v771
    %v1063 = vpop.f32.mrb[0].mxu0
    %v1064 = vadd.f32 %v817, %v1063
    %v1065 = vpop.f32.mrb[0].mxu0
    %v1066 = vadd.f32 %v821, %v1065
    %v1067 = vpop.f32.mrb[0].mxu0
    %v1068 = vadd.f32 %v817, %v1067
    %v1069 = vpop.f32.mrb[0].mxu0
    %v1070 = vadd.f32 %v821, %v1069
    %1071 = vdwg.mxu0
    %v1072 = vmax.f32 %v1021, 0.0
    %v1073 = vmax.f32 %v1023, 0.0
    %v1074 = vmax.f32 %v1064, 0.0
    %v1075 = vmax.f32 %v1066, 0.0
    %v1076 = vmax.f32 %v1025, 0.0
    %v1077 = vmax.f32 %v1027, 0.0
    %v1078 = vmax.f32 %v1068, 0.0
    %v1079 = vmax.f32 %v1070, 0.0
    %v1080 = vpack.c.bf16 %v1076, %v1072
    %v1081 = vpack.c.bf16 %v1077, %v1073
    %v1082 = vpack.c.bf16 %v1078, %v1074
    %v1083 = vpack.c.bf16 %v1079, %v1075
    %v1084 = vld [vmem:[#allocation7] sm:$0xf]
    %v1085 = vld [vmem:[#allocation7 + $0x4] sm:$0xf]
    %v1086 = vld [vmem:[#allocation7 + $0x8] sm:$0xf]
    %v1087 = vld [vmem:[#allocation7 + $0xc] sm:$0xf]
    %v1088 = vld [vmem:[#allocation7 + $0x10] sm:$0xf]
    %v1089 = vld [vmem:[#allocation7 + $0x14] sm:$0xf]
    %v1090 = vld [vmem:[#allocation7 + $0x18] sm:$0xf]
    %v1091 = vld [vmem:[#allocation7 + $0x1c] sm:$0xf]
    %v1092 = vld [vmem:[#allocation7 + $0x20] sm:$0xf]
    %v1093 = vld [vmem:[#allocation7 + $0x24] sm:$0xf]
    %v1094 = vld [vmem:[#allocation7 + $0x28] sm:$0xf]
    %v1095 = vld [vmem:[#allocation7 + $0x2c] sm:$0xf]
    %v1096 = vld [vmem:[#allocation7 + $0x30] sm:$0xf]
    %v1097 = vld [vmem:[#allocation7 + $0x34] sm:$0xf]
    %v1098 = vld [vmem:[#allocation7 + $0x38] sm:$0xf]
    %v1099 = vld [vmem:[#allocation7 + $0x3c] sm:$0xf]
    %v1100 = vld [vmem:[#allocation7 + $0x40] sm:$0xf]
    %v1101 = vld [vmem:[#allocation7 + $0x44] sm:$0xf]
    %v1102 = vld [vmem:[#allocation7 + $0x48] sm:$0xf]
    %v1103 = vld [vmem:[#allocation7 + $0x4c] sm:$0xf]
    %v1104 = vld [vmem:[#allocation7 + $0x50] sm:$0xf]
    %v1105 = vld [vmem:[#allocation7 + $0x54] sm:$0xf]
    %v1106 = vld [vmem:[#allocation7 + $0x58] sm:$0xf]
    %v1107 = vld [vmem:[#allocation7 + $0x5c] sm:$0xf]
    %v1108 = vld [vmem:[#allocation7 + $0x60] sm:$0xf]
    %v1109 = vld [vmem:[#allocation7 + $0x64] sm:$0xf]
    %v1110 = vld [vmem:[#allocation7 + $0x68] sm:$0xf]
    %v1111 = vld [vmem:[#allocation7 + $0x6c] sm:$0xf]
    %v1112 = vld [vmem:[#allocation7 + $0x70] sm:$0xf]
    %v1113 = vld [vmem:[#allocation7 + $0x74] sm:$0xf]
    %v1114 = vld [vmem:[#allocation7 + $0x78] sm:$0xf]
    %v1115 = vld [vmem:[#allocation7 + $0x7c] sm:$0xf]
    %v1116 = vld [vmem:[#allocation7 + $0x80] sm:$0xf]
    %v1117 = vld [vmem:[#allocation7 + $0x84] sm:$0xf]
    %v1118 = vld [vmem:[#allocation7 + $0x88] sm:$0xf]
    %v1119 = vld [vmem:[#allocation7 + $0x8c] sm:$0xf]
    %v1120 = vld [vmem:[#allocation7 + $0x90] sm:$0xf]
    %v1121 = vld [vmem:[#allocation7 + $0x94] sm:$0xf]
    %v1122 = vld [vmem:[#allocation7 + $0x98] sm:$0xf]
    %v1123 = vld [vmem:[#allocation7 + $0x9c] sm:$0xf]
    %v1124 = vld [vmem:[#allocation7 + $0xa0] sm:$0xf]
    %v1125 = vld [vmem:[#allocation7 + $0xa4] sm:$0xf]
    %v1126 = vld [vmem:[#allocation7 + $0xa8] sm:$0xf]
    %v1127 = vld [vmem:[#allocation7 + $0xac] sm:$0xf]
    %v1128 = vld [vmem:[#allocation7 + $0xb0] sm:$0xf]
    %v1129 = vld [vmem:[#allocation7 + $0xb4] sm:$0xf]
    %v1130 = vld [vmem:[#allocation7 + $0xb8] sm:$0xf]
    %v1131 = vld [vmem:[#allocation7 + $0xbc] sm:$0xf]
    %v1132 = vld [vmem:[#allocation7 + $0xc0] sm:$0xf]
    %v1133 = vld [vmem:[#allocation7 + $0xc4] sm:$0xf]
    %v1134 = vld [vmem:[#allocation7 + $0xc8] sm:$0xf]
    %v1135 = vld [vmem:[#allocation7 + $0xcc] sm:$0xf]
    %v1136 = vld [vmem:[#allocation7 + $0xd0] sm:$0xf]
    %v1137 = vld [vmem:[#allocation7 + $0xd4] sm:$0xf]
    %v1138 = vld [vmem:[#allocation7 + $0xd8] sm:$0xf]
    %v1139 = vld [vmem:[#allocation7 + $0xdc] sm:$0xf]
    %v1140 = vld [vmem:[#allocation7 + $0xe0] sm:$0xf]
    %v1141 = vld [vmem:[#allocation7 + $0xe4] sm:$0xf]
    %v1142 = vld [vmem:[#allocation7 + $0xe8] sm:$0xf]
    %v1143 = vld [vmem:[#allocation7 + $0xec] sm:$0xf]
    %v1144 = vld [vmem:[#allocation7 + $0xf0] sm:$0xf]
    %v1145 = vld [vmem:[#allocation7 + $0xf4] sm:$0xf]
    %v1146 = vld [vmem:[#allocation7 + $0xf8] sm:$0xf]
    %v1147 = vld [vmem:[#allocation7 + $0xfc] sm:$0xf]
    %v1148 = vld [vmem:[%s8] sm:$0x1]
    %v1150 = vlaneseq
    %v1151 = vshrl.u32 %v1150, 7
    %v1152 = vsub.s32 0, %v1151
    %v1153 = vrot.slane %v1148, %v1152
    %v1219 = vunpack.c.l.b16 %v1084
    %v1220 = vunpack.c.l.b16 %v1085
    %v1221 = vunpack.c.l.b16 %v1086
    %v1222 = vunpack.c.l.b16 %v1087
    %v1223 = vunpack.c.l.b16 %v1088
    %v1224 = vunpack.c.l.b16 %v1089
    %v1225 = vunpack.c.l.b16 %v1090
    %v1226 = vunpack.c.l.b16 %v1091
    %v1227 = vunpack.c.l.b16 %v1092
    %v1228 = vunpack.c.l.b16 %v1093
    %v1229 = vunpack.c.l.b16 %v1094
    %v1230 = vunpack.c.l.b16 %v1095
    %v1231 = vunpack.c.l.b16 %v1096
    %v1232 = vunpack.c.l.b16 %v1097
    %v1233 = vunpack.c.l.b16 %v1098
    %v1234 = vunpack.c.l.b16 %v1099
    %v1235 = vunpack.c.l.b16 %v1100
    %v1236 = vunpack.c.l.b16 %v1101
    %v1237 = vunpack.c.l.b16 %v1102
    %v1238 = vunpack.c.l.b16 %v1103
    %v1239 = vunpack.c.l.b16 %v1104
    %v1240 = vunpack.c.l.b16 %v1105
    %v1241 = vunpack.c.l.b16 %v1106
    %v1242 = vunpack.c.l.b16 %v1107
    %v1243 = vunpack.c.l.b16 %v1108
    %v1244 = vunpack.c.l.b16 %v1109
    %v1245 = vunpack.c.l.b16 %v1110
    %v1246 = vunpack.c.l.b16 %v1111
    %v1247 = vunpack.c.l.b16 %v1112
    %v1248 = vunpack.c.l.b16 %v1113
    %v1249 = vunpack.c.l.b16 %v1114
    %v1250 = vunpack.c.l.b16 %v1115
    %v1251 = vunpack.c.l.b16 %v1116
    %v1252 = vunpack.c.l.b16 %v1117
    %v1253 = vunpack.c.l.b16 %v1118
    %v1254 = vunpack.c.l.b16 %v1119
    %v1255 = vunpack.c.l.b16 %v1120
    %v1256 = vunpack.c.l.b16 %v1121
    %v1257 = vunpack.c.l.b16 %v1122
    %v1258 = vunpack.c.l.b16 %v1123
    %v1259 = vunpack.c.l.b16 %v1124
    %v1260 = vunpack.c.l.b16 %v1125
    %v1261 = vunpack.c.l.b16 %v1126
    %v1262 = vunpack.c.l.b16 %v1127
    %v1263 = vunpack.c.l.b16 %v1128
    %v1264 = vunpack.c.l.b16 %v1129
    %v1265 = vunpack.c.l.b16 %v1130
    %v1266 = vunpack.c.l.b16 %v1131
    %v1267 = vunpack.c.l.b16 %v1132
    %v1268 = vunpack.c.l.b16 %v1133
    %v1269 = vunpack.c.l.b16 %v1134
    %v1270 = vunpack.c.l.b16 %v1135
    %v1271 = vunpack.c.l.b16 %v1136
    %v1272 = vunpack.c.l.b16 %v1137
    %v1273 = vunpack.c.l.b16 %v1138
    %v1274 = vunpack.c.l.b16 %v1139
    %v1275 = vunpack.c.l.b16 %v1140
    %v1276 = vunpack.c.l.b16 %v1141
    %v1277 = vunpack.c.l.b16 %v1142
    %v1278 = vunpack.c.l.b16 %v1143
    %v1279 = vunpack.c.l.b16 %v1144
    %v1280 = vunpack.c.l.b16 %v1145
    %v1281 = vunpack.c.l.b16 %v1146
    %v1282 = vunpack.c.l.b16 %v1147
    %v1283 = vpack.c.b16 %v1220, %v1219
    %v1284 = vpack.c.b16 %v1222, %v1221
    %v1285 = vpack.c.b16 %v1224, %v1223
    %v1286 = vpack.c.b16 %v1226, %v1225
    %v1287 = vpack.c.b16 %v1228, %v1227
    %v1288 = vpack.c.b16 %v1230, %v1229
    %v1289 = vpack.c.b16 %v1232, %v1231
    %v1290 = vpack.c.b16 %v1234, %v1233
    %v1291 = vpack.c.b16 %v1236, %v1235
    %v1292 = vpack.c.b16 %v1238, %v1237
    %v1293 = vpack.c.b16 %v1240, %v1239
    %v1294 = vpack.c.b16 %v1242, %v1241
    %v1295 = vpack.c.b16 %v1244, %v1243
    %v1296 = vpack.c.b16 %v1246, %v1245
    %v1297 = vpack.c.b16 %v1248, %v1247
    %v1298 = vpack.c.b16 %v1250, %v1249
    %v1299 = vpack.c.b16 %v1252, %v1251
    %v1300 = vpack.c.b16 %v1254, %v1253
    %v1301 = vpack.c.b16 %v1256, %v1255
    %v1302 = vpack.c.b16 %v1258, %v1257
    %v1303 = vpack.c.b16 %v1260, %v1259
    %v1304 = vpack.c.b16 %v1262, %v1261
    %v1305 = vpack.c.b16 %v1264, %v1263
    %v1306 = vpack.c.b16 %v1266, %v1265
    %v1307 = vpack.c.b16 %v1268, %v1267
    %v1308 = vpack.c.b16 %v1270, %v1269
    %v1309 = vpack.c.b16 %v1272, %v1271
    %v1310 = vpack.c.b16 %v1274, %v1273
    %v1311 = vpack.c.b16 %v1276, %v1275
    %v1312 = vpack.c.b16 %v1278, %v1277
    %v1313 = vpack.c.b16 %v1280, %v1279
    %v1314 = vpack.c.b16 %v1282, %v1281
    %1347 = vmatprep.subr.bf16.mxu0 0
    %1348 = vmatpush1.bf16.msra.mxu0 %v1283
    %1349 = vmatprep.subr.bf16.mxu0 0
    %1350 = vmatpush1.bf16.msra.mxu0 %v1284
    %1351 = vmatprep.subr.bf16.mxu0 0
    %1352 = vmatpush1.bf16.msra.mxu0 %v1285
    %1353 = vmatprep.subr.bf16.mxu0 0
    %1354 = vmatpush1.bf16.msra.mxu0 %v1286
    %1355 = vmatprep.subr.bf16.mxu0 0
    %1356 = vmatpush1.bf16.msra.mxu0 %v1287
    %1357 = vmatprep.subr.bf16.mxu0 0
    %1358 = vmatpush1.bf16.msra.mxu0 %v1288
    %1359 = vmatprep.subr.bf16.mxu0 0
    %1360 = vmatpush1.bf16.msra.mxu0 %v1289
    %1361 = vmatprep.subr.bf16.mxu0 0
    %1362 = vmatpush1.bf16.msra.mxu0 %v1290
    %1363 = vmatprep.subr.bf16.mxu0 0
    %1364 = vmatpush1.bf16.msra.mxu0 %v1291
    %1365 = vmatprep.subr.bf16.mxu0 0
    %1366 = vmatpush1.bf16.msra.mxu0 %v1292
    %1367 = vmatprep.subr.bf16.mxu0 0
    %1368 = vmatpush1.bf16.msra.mxu0 %v1293
    %1369 = vmatprep.subr.bf16.mxu0 0
    %1370 = vmatpush1.bf16.msra.mxu0 %v1294
    %1371 = vmatprep.subr.bf16.mxu0 0
    %1372 = vmatpush1.bf16.msra.mxu0 %v1295
    %1373 = vmatprep.subr.bf16.mxu0 0
    %1374 = vmatpush1.bf16.msra.mxu0 %v1296
    %1375 = vmatprep.subr.bf16.mxu0 0
    %1376 = vmatpush1.bf16.msra.mxu0 %v1297
    %1377 = vmatprep.subr.bf16.mxu0 0
    %1378 = vmatpush1.bf16.msra.mxu0 %v1298
    %1379 = vmatprep.mubr.bf16.mxu0 %v1081
    %1380 = vmatmul.mubr.bf16.gmra.mrb[0].mxu0 %v1080
    %v1381 = vpop.f32.mrb[0].mxu0
    %v1382 = vadd.f32 %v1153, %v1381
    %v1383 = vpop.f32.mrb[0].mxu0
    %v1384 = vpop.f32.mrb[0].mxu0
    %v1385 = vadd.f32 %v1153, %v1384
    %v1386 = vpop.f32.mrb[0].mxu0
    %1387 = vdwg.mxu0
    %1388 = vmatprep.subr.bf16.mxu0 0
    %1389 = vmatpush1.bf16.msra.mxu0 %v1299
    %1390 = vmatprep.subr.bf16.mxu0 0
    %1391 = vmatpush1.bf16.msra.mxu0 %v1300
    %1392 = vmatprep.subr.bf16.mxu0 0
    %1393 = vmatpush1.bf16.msra.mxu0 %v1301
    %1394 = vmatprep.subr.bf16.mxu0 0
    %1395 = vmatpush1.bf16.msra.mxu0 %v1302
    %1396 = vmatprep.subr.bf16.mxu0 0
    %1397 = vmatpush1.bf16.msra.mxu0 %v1303
    %1398 = vmatprep.subr.bf16.mxu0 0
    %1399 = vmatpush1.bf16.msra.mxu0 %v1304
    %1400 = vmatprep.subr.bf16.mxu0 0
    %1401 = vmatpush1.bf16.msra.mxu0 %v1305
    %1402 = vmatprep.subr.bf16.mxu0 0
    %1403 = vmatpush1.bf16.msra.mxu0 %v1306
    %1404 = vmatprep.subr.bf16.mxu0 0
    %1405 = vmatpush1.bf16.msra.mxu0 %v1307
    %1406 = vmatprep.subr.bf16.mxu0 0
    %1407 = vmatpush1.bf16.msra.mxu0 %v1308
    %1408 = vmatprep.subr.bf16.mxu0 0
    %1409 = vmatpush1.bf16.msra.mxu0 %v1309
    %1410 = vmatprep.subr.bf16.mxu0 0
    %1411 = vmatpush1.bf16.msra.mxu0 %v1310
    %1412 = vmatprep.subr.bf16.mxu0 0
    %1413 = vmatpush1.bf16.msra.mxu0 %v1311
    %1414 = vmatprep.subr.bf16.mxu0 0
    %1415 = vmatpush1.bf16.msra.mxu0 %v1312
    %1416 = vmatprep.subr.bf16.mxu0 0
    %1417 = vmatpush1.bf16.msra.mxu0 %v1313
    %1418 = vmatprep.subr.bf16.mxu0 0
    %1419 = vmatpush1.bf16.msra.mxu0 %v1314
    %1420 = vmatprep.mubr.bf16.mxu0 %v1083
    %1421 = vmatmul.mubr.bf16.gmra.mrb[0].mxu0 %v1082
    %v1422 = vpop.f32.mrb[0].mxu0
    %v1423 = vadd.f32 %v1382, %v1422
    %v1424 = vpop.f32.mrb[0].mxu0
    %v1425 = vpop.f32.mrb[0].mxu0
    %v1426 = vadd.f32 %v1385, %v1425
    %v1427 = vpop.f32.mrb[0].mxu0
    %1428 = vdwg.mxu0
    %1429 = vst [vmem:[%s10] sm:$0xff] %v1423
    %1430 = vst [vmem:[%s10 + $0x8] sm:$0xff] %v1426
    // Predicated region
    $region58: #{neural_network4_forward.1} parent=1 // pred_check
      _
    $region59: #{neural_network4_forward.1} parent=1 // pred_check_branch
      %1432 = sbr.rel (0) target = $region61
    $region60: #{neural_network4_forward.1} parent=1 // pred_region
      _
    $region61: #{neural_network4_forward.1} parent=1 // pred_fallthru
      _
    // Predicated region
    $region62: #{neural_network4_forward.1} parent=1 // pred_check
      _
    $region63: #{neural_network4_forward.1} parent=1 // pred_check_branch
      %1434 = sbr.rel (0) target = $region65
    $region64: #{neural_network4_forward.1} parent=1 // pred_region
      _
    $region65: #{neural_network4_forward.1} parent=1 // pred_fallthru
      _
    // Predicated region
    $region66: #{neural_network4_forward.1} parent=1 // pred_check
      _
    $region67: #{neural_network4_forward.1} parent=1 // pred_check_branch
      %1436 = sbr.rel (0) target = $region69
    $region68: #{neural_network4_forward.1} parent=1 // pred_region
      _
    $region69: #{neural_network4_forward.1} parent=1 // pred_fallthru
      _
    // Predicated region
    $region70: #{neural_network4_forward.1} parent=1 // pred_check
      _
    $region71: #{neural_network4_forward.1} parent=1 // pred_check_branch
      %1438 = sbr.rel (0) target = $region73
    $region72: #{neural_network4_forward.1} parent=1 // pred_region
      _
    $region73: #{neural_network4_forward.1} parent=1 // pred_fallthru
      _
    %1439 = vsyncpa [#allocation3], 1
    %1440 = vsyncpa [#allocation5], 1
    %1441 = vsyncpa [#allocation8], 1

// kernel: neural_network4_forward.1
$region0: #{neural_network4_forward.1}
  #allocation0 [shape = 'u32[]', space=smem, size = 0x4, offset = 0x4, fixed_abs, tag = 'smem constant byte address 0x4 - core index']
  #allocation1 [shape = 'u32[144,128]{1,0:T(1,128)}', space=vmem, size = 0x12000, scoped, tag = 'internal scratch']
  %s0 = inlined_call_operand.vmem [shape: bf16[16,128], index: 0, kind: input, shape index: {}]
  %s1 = inlined_call_operand.hbm [shape: bf16[128,512], index: 1, kind: input, shape index: {}]
  %s2 = inlined_call_operand.vmem [shape: f32[1,512], index: 2, kind: input, shape index: {}]
  %s3 = inlined_call_operand.hbm [shape: bf16[512,128], index: 3, kind: input, shape index: {}]
  %s4 = inlined_call_operand.vmem [shape: f32[1,128], index: 4, kind: input, shape index: {}]
  %s5 = inlined_call_operand.hbm [shape: bf16[128,512], index: 5, kind: input, shape index: {}]
  %s6 = inlined_call_operand.vmem [shape: f32[1,512], index: 6, kind: input, shape index: {}]
  %s7 = inlined_call_operand.hbm [shape: bf16[512,128], index: 7, kind: input, shape index: {}]
  %s8 = inlined_call_operand.vmem [shape: f32[1,128], index: 8, kind: input, shape index: {}]
  %s9 = inlined_call_operand.vmem [shape: f32[1,128], index: 9, kind: input, shape index: {}]
  %s10 = inlined_call_operand.vmem [shape: f32[16,128], index: 10, kind: output, shape index: {0}]
  %s11 = inlined_call_operand.vmem [shape: f32[16,128], index: 11, kind: output, shape index: {1}]
  %12 = xla_tuple %s10, %s11
  %s13 = sld [smem:[#allocation0]]
  $region74: #{neural_network4_forward.1} parent=0
    _
  %s15 = ssub.s32 1, %s13
  %s16 = scalar_select 0, %s15, %s13
  $region1: #{neural_network4_forward.1} parent=0
    #allocation2 [shape = 'u8[131072]{0}', space=vmem, size = 0x20000, scoped, tag = 'input window, operand 1, single buffered']
    #allocation3 [shape = 's32[1]{0}', space=sflag, size = 0x4, scoped, tag = 'scoped memory for neural_network4_forward.1']
    #allocation4 [shape = 'u8[131072]{0}', space=vmem, size = 0x20000, scoped, tag = 'input window, operand 3, single buffered']
    #allocation5 [shape = 's32[1]{0}', space=sflag, size = 0x4, scoped, tag = 'scoped memory for neural_network4_forward.1']
    #allocation6 [shape = 'u8[131072]{0}', space=vmem, size = 0x20000, scoped, tag = 'input window, operand 5, single buffered']
    #allocation7 [shape = 'u8[131072]{0}', space=vmem, size = 0x20000, scoped, tag = 'input window, operand 7, single buffered']
    #allocation8 [shape = 's32[1]{0}', space=sflag, size = 0x4, scoped, tag = 'scoped memory for neural_network4_forward.1']
    %17 = vsyncpa [#allocation3], 0
    %18 = vsyncpa [#allocation5], 0
    %19 = vsyncpa [#allocation8], 0
    // Predicated region
    $region2: #{neural_network4_forward.1} parent=1 // pred_check
      _
    $region3: #{neural_network4_forward.1} parent=1 // pred_check_branch
      %21 = sbr.rel (0) target = $region5
    $region4: #{neural_network4_forward.1} parent=1 // pred_region
      _
    $region5: #{neural_network4_forward.1} parent=1 // pred_fallthru
      _
    // Predicated region
    $region6: #{neural_network4_forward.1} parent=1 // pred_check
      _
    $region7: #{neural_network4_forward.1} parent=1 // pred_check_branch
      %23 = sbr.rel (0) target = $region9
    $region8: #{neural_network4_forward.1} parent=1 // pred_region
      %s25 = ssub.s32 4096, 4096
      %26 = vsyncadd [#allocation3], %s25
      %s27 = sshll.u32 [#allocation2], 4
      %s28 = int_to_ptr.vmem [resolvable:$true] %s27
      %33 = dma.hbm_to_vmem [thread:$0]  %s1, 4096, %s28, [#allocation3], 256, 256, 16
    $region9: #{neural_network4_forward.1} parent=1 // pred_fallthru
      _
    // Predicated region
    $region10: #{neural_network4_forward.1} parent=1 // pred_check
      _
    $region11: #{neural_network4_forward.1} parent=1 // pred_check_branch
      %35 = sbr.rel (0) target = $region13
    $region12: #{neural_network4_forward.1} parent=1 // pred_region
      _
    $region13: #{neural_network4_forward.1} parent=1 // pred_fallthru
      _
    // Predicated region
    $region14: #{neural_network4_forward.1} parent=1 // pred_check
      _
    $region15: #{neural_network4_forward.1} parent=1 // pred_check_branch
      %37 = sbr.rel (0) target = $region17
    $region16: #{neural_network4_forward.1} parent=1 // pred_region
      %s39 = ssub.s32 4096, 4096
      %40 = vsyncadd [#allocation5], %s39
      %s41 = sshll.u32 [#allocation4], 4
      %s42 = int_to_ptr.vmem [resolvable:$true] %s41
      %47 = dma.hbm_to_vmem [thread:$0]  %s3, 4096, %s42, [#allocation5], 64, 64, 4
    $region17: #{neural_network4_forward.1} parent=1 // pred_fallthru
      _
    // Predicated region
    $region18: #{neural_network4_forward.1} parent=1 // pred_check
      _
    $region19: #{neural_network4_forward.1} parent=1 // pred_check_branch
      %49 = sbr.rel (0) target = $region21
    $region20: #{neural_network4_forward.1} parent=1 // pred_region
      _
    $region21: #{neural_network4_forward.1} parent=1 // pred_fallthru
      _
    // Predicated region
    $region22: #{neural_network4_forward.1} parent=1 // pred_check
      _
    $region23: #{neural_network4_forward.1} parent=1 // pred_check_branch
      %51 = sbr.rel (0) target = $region25
    $region24: #{neural_network4_forward.1} parent=1 // pred_region
      %s53 = ssub.s32 4096, 4096
      %54 = vsyncadd [#allocation5], %s53
      %s55 = sshll.u32 [#allocation6], 4
      %s56 = int_to_ptr.vmem [resolvable:$true] %s55
      %61 = dma.hbm_to_vmem [thread:$0]  %s5, 4096, %s56, [#allocation5], 256, 256, 16
    $region25: #{neural_network4_forward.1} parent=1 // pred_fallthru
      _
    // Predicated region
    $region26: #{neural_network4_forward.1} parent=1 // pred_check
      _
    $region27: #{neural_network4_forward.1} parent=1 // pred_check_branch
      %63 = sbr.rel (0) target = $region29
    $region28: #{neural_network4_forward.1} parent=1 // pred_region
      _
    $region29: #{neural_network4_forward.1} parent=1 // pred_fallthru
      _
    // Predicated region
    $region30: #{neural_network4_forward.1} parent=1 // pred_check
      _
    $region31: #{neural_network4_forward.1} parent=1 // pred_check_branch
      %65 = sbr.rel (0) target = $region33
    $region32: #{neural_network4_forward.1} parent=1 // pred_region
      %s67 = ssub.s32 4096, 4096
      %68 = vsyncadd [#allocation8], %s67
      %s69 = sshll.u32 [#allocation7], 4
      %s70 = int_to_ptr.vmem [resolvable:$true] %s69
      %75 = dma.hbm_to_vmem [thread:$0]  %s7, 4096, %s70, [#allocation8], 64, 64, 4
    $region33: #{neural_network4_forward.1} parent=1 // pred_fallthru
      _
    // Predicated region
    $region34: #{neural_network4_forward.1} parent=1 // pred_check
      _
    $region35: #{neural_network4_forward.1} parent=1 // pred_check_branch
      %77 = sbr.rel (0) target = $region37
    $region36: #{neural_network4_forward.1} parent=1 // pred_region
      _
    $region37: #{neural_network4_forward.1} parent=1 // pred_fallthru
      _
    // Predicated region
    $region38: #{neural_network4_forward.1} parent=1 // pred_check
      _
    $region39: #{neural_network4_forward.1} parent=1 // pred_check_branch
      %79 = sbr.rel (0) target = $region41
    $region40: #{neural_network4_forward.1} parent=1 // pred_region
      _
    $region41: #{neural_network4_forward.1} parent=1 // pred_fallthru
      _
    // Predicated region
    $region42: #{neural_network4_forward.1} parent=1 // pred_check
      _
    $region43: #{neural_network4_forward.1} parent=1 // pred_check_branch
      %81 = sbr.rel (0) target = $region45
    $region44: #{neural_network4_forward.1} parent=1 // pred_region
      %82 = dma.done [#allocation3], 4096
    $region45: #{neural_network4_forward.1} parent=1 // pred_fallthru
      _
    // Predicated region
    $region46: #{neural_network4_forward.1} parent=1 // pred_check
      _
    $region47: #{neural_network4_forward.1} parent=1 // pred_check_branch
      %84 = sbr.rel (0) target = $region49
    $region48: #{neural_network4_forward.1} parent=1 // pred_region
      %85 = dma.done [#allocation5], 4096
    $region49: #{neural_network4_forward.1} parent=1 // pred_fallthru
      _
    // Predicated region
    $region50: #{neural_network4_forward.1} parent=1 // pred_check
      _
    $region51: #{neural_network4_forward.1} parent=1 // pred_check_branch
      %87 = sbr.rel (0) target = $region53
    $region52: #{neural_network4_forward.1} parent=1 // pred_region
      %88 = dma.done [#allocation5], 4096
    $region53: #{neural_network4_forward.1} parent=1 // pred_fallthru
      _
    // Predicated region
    $region54: #{neural_network4_forward.1} parent=1 // pred_check
      _
    $region55: #{neural_network4_forward.1} parent=1 // pred_check_branch
      %90 = sbr.rel (0) target = $region57
    $region56: #{neural_network4_forward.1} parent=1 // pred_region
      %91 = dma.done [#allocation8], 4096
    $region57: #{neural_network4_forward.1} parent=1 // pred_fallthru
      _
    %v93 = vld [vmem:[%s0] sm:$0xf]
    %v94 = vld [vmem:[%s0 + $0x4] sm:$0xf]
    %v95 = vld [vmem:[#allocation2] sm:$0xff]
    %v96 = vld [vmem:[#allocation2 + $0x8] sm:$0xff]
    %v97 = vld [vmem:[#allocation2 + $0x10] sm:$0xff]
    %v98 = vld [vmem:[#allocation2 + $0x18] sm:$0xff]
    %v99 = vld [vmem:[#allocation2 + $0x20] sm:$0xff]
    %v100 = vld [vmem:[#allocation2 + $0x28] sm:$0xff]
    %v101 = vld [vmem:[#allocation2 + $0x30] sm:$0xff]
    %v102 = vld [vmem:[#allocation2 + $0x38] sm:$0xff]
    %v103 = vld [vmem:[#allocation2 + $0x40] sm:$0xff]
    %v104 = vld [vmem:[#allocation2 + $0x48] sm:$0xff]
    %v105 = vld [vmem:[#allocation2 + $0x50] sm:$0xff]
    %v106 = vld [vmem:[#allocation2 + $0x58] sm:$0xff]
    %v107 = vld [vmem:[#allocation2 + $0x60] sm:$0xff]
    %v108 = vld [vmem:[#allocation2 + $0x68] sm:$0xff]
    %v109 = vld [vmem:[#allocation2 + $0x70] sm:$0xff]
    %v110 = vld [vmem:[#allocation2 + $0x78] sm:$0xff]
    %v111 = vld [vmem:[#allocation2 + $0x80] sm:$0xff]
    %v112 = vld [vmem:[#allocation2 + $0x88] sm:$0xff]
    %v113 = vld [vmem:[#allocation2 + $0x90] sm:$0xff]
    %v114 = vld [vmem:[#allocation2 + $0x98] sm:$0xff]
    %v115 = vld [vmem:[#allocation2 + $0xa0] sm:$0xff]
    %v116 = vld [vmem:[#allocation2 + $0xa8] sm:$0xff]
    %v117 = vld [vmem:[#allocation2 + $0xb0] sm:$0xff]
    %v118 = vld [vmem:[#allocation2 + $0xb8] sm:$0xff]
    %v119 = vld [vmem:[#allocation2 + $0xc0] sm:$0xff]
    %v120 = vld [vmem:[#allocation2 + $0xc8] sm:$0xff]
    %v121 = vld [vmem:[#allocation2 + $0xd0] sm:$0xff]
    %v122 = vld [vmem:[#allocation2 + $0xd8] sm:$0xff]
    %v123 = vld [vmem:[#allocation2 + $0xe0] sm:$0xff]
    %v124 = vld [vmem:[#allocation2 + $0xe8] sm:$0xff]
    %v125 = vld [vmem:[#allocation2 + $0xf0] sm:$0xff]
    %v126 = vld [vmem:[#allocation2 + $0xf8] sm:$0xff]
    %v127 = vld [vmem:[%s2] sm:$0xf]
    %v129 = vlaneseq
    %v130 = vshrl.u32 %v129, 7
    %v131 = vsub.s32 0, %v130
    %v132 = vrot.slane %v127, %v131
    %v133 = vlaneseq
    %v134 = vshrl.u32 %v133, 7
    %v135 = vsub.s32 1, %v134
    %v136 = vrot.slane %v127, %v135
    %v137 = vlaneseq
    %v138 = vshrl.u32 %v137, 7
    %v139 = vsub.s32 2, %v138
    %v140 = vrot.slane %v127, %v139
    %v141 = vlaneseq
    %v142 = vshrl.u32 %v141, 7
    %v143 = vsub.s32 3, %v142
    %v144 = vrot.slane %v127, %v143
    %v151 = vunpack.c.l.b16 %v93
    %v152 = vunpack.c.l.b16 %v94
    %v153 = vpack.c.b16 %v152, %v151
    %v187 = vunpack.c.l.b16 %v95
    %v188 = vunpack.c.h.b16 %v95
    %v189 = vunpack.c.l.b16 %v96
    %v190 = vunpack.c.h.b16 %v96
    %v191 = vunpack.c.l.b16 %v97
    %v192 = vunpack.c.h.b16 %v97
    %v193 = vunpack.c.l.b16 %v98
    %v194 = vunpack.c.h.b16 %v98
    %v195 = vunpack.c.l.b16 %v99
    %v196 = vunpack.c.h.b16 %v99
    %v197 = vunpack.c.l.b16 %v100
    %v198 = vunpack.c.h.b16 %v100
    %v199 = vunpack.c.l.b16 %v101
    %v200 = vunpack.c.h.b16 %v101
    %v201 = vunpack.c.l.b16 %v102
    %v202 = vunpack.c.h.b16 %v102
    %v203 = vunpack.c.l.b16 %v103
    %v204 = vunpack.c.h.b16 %v103
    %v205 = vunpack.c.l.b16 %v104
    %v206 = vunpack.c.h.b16 %v104
    %v207 = vunpack.c.l.b16 %v105
    %v208 = vunpack.c.h.b16 %v105
    %v209 = vunpack.c.l.b16 %v106
    %v210 = vunpack.c.h.b16 %v106
    %v211 = vunpack.c.l.b16 %v107
    %v212 = vunpack.c.h.b16 %v107
    %v213 = vunpack.c.l.b16 %v108
    %v214 = vunpack.c.h.b16 %v108
    %v215 = vunpack.c.l.b16 %v109
    %v216 = vunpack.c.h.b16 %v109
    %v217 = vunpack.c.l.b16 %v110
    %v218 = vunpack.c.h.b16 %v110
    %v219 = vunpack.c.l.b16 %v111
    %v220 = vunpack.c.h.b16 %v111
    %v221 = vunpack.c.l.b16 %v112
    %v222 = vunpack.c.h.b16 %v112
    %v223 = vunpack.c.l.b16 %v113
    %v224 = vunpack.c.h.b16 %v113
    %v225 = vunpack.c.l.b16 %v114
    %v226 = vunpack.c.h.b16 %v114
    %v227 = vunpack.c.l.b16 %v115
    %v228 = vunpack.c.h.b16 %v115
    %v229 = vunpack.c.l.b16 %v116
    %v230 = vunpack.c.h.b16 %v116
    %v231 = vunpack.c.l.b16 %v117
    %v232 = vunpack.c.h.b16 %v117
    %v233 = vunpack.c.l.b16 %v118
    %v234 = vunpack.c.h.b16 %v118
    %v235 = vunpack.c.l.b16 %v119
    %v236 = vunpack.c.h.b16 %v119
    %v237 = vunpack.c.l.b16 %v120
    %v238 = vunpack.c.h.b16 %v120
    %v239 = vunpack.c.l.b16 %v121
    %v240 = vunpack.c.h.b16 %v121
    %v241 = vunpack.c.l.b16 %v122
    %v242 = vunpack.c.h.b16 %v122
    %v243 = vunpack.c.l.b16 %v123
    %v244 = vunpack.c.h.b16 %v123
    %v245 = vunpack.c.l.b16 %v124
    %v246 = vunpack.c.h.b16 %v124
    %v247 = vunpack.c.l.b16 %v125
    %v248 = vunpack.c.h.b16 %v125
    %v249 = vunpack.c.l.b16 %v126
    %v250 = vunpack.c.h.b16 %v126
    %v251 = vpack.c.b16 %v191, %v187
    %v252 = vpack.c.b16 %v192, %v188
    %v253 = vpack.c.b16 %v193, %v189
    %v254 = vpack.c.b16 %v194, %v190
    %v255 = vpack.c.b16 %v199, %v195
    %v256 = vpack.c.b16 %v200, %v196
    %v257 = vpack.c.b16 %v201, %v197
    %v258 = vpack.c.b16 %v202, %v198
    %v259 = vpack.c.b16 %v207, %v203
    %v260 = vpack.c.b16 %v208, %v204
    %v261 = vpack.c.b16 %v209, %v205
    %v262 = vpack.c.b16 %v210, %v206
    %v263 = vpack.c.b16 %v215, %v211
    %v264 = vpack.c.b16 %v216, %v212
    %v265 = vpack.c.b16 %v217, %v213
    %v266 = vpack.c.b16 %v218, %v214
    %v267 = vpack.c.b16 %v223, %v219
    %v268 = vpack.c.b16 %v224, %v220
    %v269 = vpack.c.b16 %v225, %v221
    %v270 = vpack.c.b16 %v226, %v222
    %v271 = vpack.c.b16 %v231, %v227
    %v272 = vpack.c.b16 %v232, %v228
    %v273 = vpack.c.b16 %v233, %v229
    %v274 = vpack.c.b16 %v234, %v230
    %v275 = vpack.c.b16 %v239, %v235
    %v276 = vpack.c.b16 %v240, %v236
    %v277 = vpack.c.b16 %v241, %v237
    %v278 = vpack.c.b16 %v242, %v238
    %v279 = vpack.c.b16 %v247, %v243
    %v280 = vpack.c.b16 %v248, %v244
    %v281 = vpack.c.b16 %v249, %v245
    %v282 = vpack.c.b16 %v250, %v246
    %315 = vmatprep.subr.bf16.mxu0 %v252
    %316 = vmatpush1.bf16.msra.mxu0 %v251
    %317 = vmatprep.subr.bf16.mxu0 %v256
    %318 = vmatpush1.bf16.msra.mxu0 %v255
    %319 = vmatprep.subr.bf16.mxu0 %v260
    %320 = vmatpush1.bf16.msra.mxu0 %v259
    %321 = vmatprep.subr.bf16.mxu0 %v264
    %322 = vmatpush1.bf16.msra.mxu0 %v263
    %323 = vmatprep.subr.bf16.mxu0 %v268
    %324 = vmatpush1.bf16.msra.mxu0 %v267
    %325 = vmatprep.subr.bf16.mxu0 %v272
    %326 = vmatpush1.bf16.msra.mxu0 %v271
    %327 = vmatprep.subr.bf16.mxu0 %v276
    %328 = vmatpush1.bf16.msra.mxu0 %v275
    %329 = vmatprep.subr.bf16.mxu0 %v280
    %330 = vmatpush1.bf16.msra.mxu0 %v279
    %331 = vmatprep.subr.bf16.mxu0 0
    %332 = vmatpush1.bf16.msra.mxu0 0
    %333 = vmatprep.subr.bf16.mxu0 0
    %334 = vmatpush1.bf16.msra.mxu0 0
    %335 = vmatprep.subr.bf16.mxu0 0
    %336 = vmatpush1.bf16.msra.mxu0 0
    %337 = vmatprep.subr.bf16.mxu0 0
    %338 = vmatpush1.bf16.msra.mxu0 0
    %339 = vmatprep.subr.bf16.mxu0 0
    %340 = vmatpush1.bf16.msra.mxu0 0
    %341 = vmatprep.subr.bf16.mxu0 0
    %342 = vmatpush1.bf16.msra.mxu0 0
    %343 = vmatprep.subr.bf16.mxu0 0
    %344 = vmatpush1.bf16.msra.mxu0 0
    %345 = vmatprep.subr.bf16.mxu0 0
    %346 = vmatpush1.bf16.msra.mxu0 0
    %347 = vmatprep.mubr.bf16.mxu0 0
    %348 = vmatmul.mubr.bf16.gmra.mrb[0].mxu0 %v153
    %v349 = vpop.f32.mrb[0].mxu0
    %v350 = vadd.f32 %v132, %v349
    %v351 = vpop.f32.mrb[0].mxu0
    %v352 = vadd.f32 %v136, %v351
    %v353 = vpop.f32.mrb[0].mxu0
    %v354 = vadd.f32 %v132, %v353
    %v355 = vpop.f32.mrb[0].mxu0
    %v356 = vadd.f32 %v136, %v355
    %357 = vdwg.mxu0
    %358 = vmatprep.subr.bf16.mxu0 %v254
    %359 = vmatpush1.bf16.msra.mxu0 %v253
    %360 = vmatprep.subr.bf16.mxu0 %v258
    %361 = vmatpush1.bf16.msra.mxu0 %v257
    %362 = vmatprep.subr.bf16.mxu0 %v262
    %363 = vmatpush1.bf16.msra.mxu0 %v261
    %364 = vmatprep.subr.bf16.mxu0 %v266
    %365 = vmatpush1.bf16.msra.mxu0 %v265
    %366 = vmatprep.subr.bf16.mxu0 %v270
    %367 = vmatpush1.bf16.msra.mxu0 %v269
    %368 = vmatprep.subr.bf16.mxu0 %v274
    %369 = vmatpush1.bf16.msra.mxu0 %v273
    %370 = vmatprep.subr.bf16.mxu0 %v278
    %371 = vmatpush1.bf16.msra.mxu0 %v277
    %372 = vmatprep.subr.bf16.mxu0 %v282
    %373 = vmatpush1.bf16.msra.mxu0 %v281
    %374 = vmatprep.subr.bf16.mxu0 0
    %375 = vmatpush1.bf16.msra.mxu0 0
    %376 = vmatprep.subr.bf16.mxu0 0
    %377 = vmatpush1.bf16.msra.mxu0 0
    %378 = vmatprep.subr.bf16.mxu0 0
    %379 = vmatpush1.bf16.msra.mxu0 0
    %380 = vmatprep.subr.bf16.mxu0 0
    %381 = vmatpush1.bf16.msra.mxu0 0
    %382 = vmatprep.subr.bf16.mxu0 0
    %383 = vmatpush1.bf16.msra.mxu0 0
    %384 = vmatprep.subr.bf16.mxu0 0
    %385 = vmatpush1.bf16.msra.mxu0 0
    %386 = vmatprep.subr.bf16.mxu0 0
    %387 = vmatpush1.bf16.msra.mxu0 0
    %388 = vmatprep.subr.bf16.mxu0 0
    %389 = vmatpush1.bf16.msra.mxu0 0
    %390 = vmatprep.mubr.bf16.mxu0 0
    %391 = vmatmul.mubr.bf16.gmra.mrb[0].mxu0 %v153
    %v392 = vpop.f32.mrb[0].mxu0
    %v393 = vadd.f32 %v140, %v392
    %v394 = vpop.f32.mrb[0].mxu0
    %v395 = vadd.f32 %v144, %v394
    %v396 = vpop.f32.mrb[0].mxu0
    %v397 = vadd.f32 %v140, %v396
    %v398 = vpop.f32.mrb[0].mxu0
    %v399 = vadd.f32 %v144, %v398
    %400 = vdwg.mxu0
    %v401 = vmax.f32 %v350, 0.0
    %v402 = vmax.f32 %v352, 0.0
    %v403 = vmax.f32 %v393, 0.0
    %v404 = vmax.f32 %v395, 0.0
    %v405 = vmax.f32 %v354, 0.0
    %v406 = vmax.f32 %v356, 0.0
    %v407 = vmax.f32 %v397, 0.0
    %v408 = vmax.f32 %v399, 0.0
    %v409 = vpack.c.bf16 %v405, %v401
    %v410 = vpack.c.bf16 %v406, %v402
    %v411 = vpack.c.bf16 %v407, %v403
    %v412 = vpack.c.bf16 %v408, %v404
    %v413 = vld [vmem:[#allocation4] sm:$0xf]
    %v414 = vld [vmem:[#allocation4 + $0x4] sm:$0xf]
    %v415 = vld [vmem:[#allocation4 + $0x8] sm:$0xf]
    %v416 = vld [vmem:[#allocation4 + $0xc] sm:$0xf]
    %v417 = vld [vmem:[#allocation4 + $0x10] sm:$0xf]
    %v418 = vld [vmem:[#allocation4 + $0x14] sm:$0xf]
    %v419 = vld [vmem:[#allocation4 + $0x18] sm:$0xf]
    %v420 = vld [vmem:[#allocation4 + $0x1c] sm:$0xf]
    %v421 = vld [vmem:[#allocation4 + $0x20] sm:$0xf]
    %v422 = vld [vmem:[#allocation4 + $0x24] sm:$0xf]
    %v423 = vld [vmem:[#allocation4 + $0x28] sm:$0xf]
    %v424 = vld [vmem:[#allocation4 + $0x2c] sm:$0xf]
    %v425 = vld [vmem:[#allocation4 + $0x30] sm:$0xf]
    %v426 = vld [vmem:[#allocation4 + $0x34] sm:$0xf]
    %v427 = vld [vmem:[#allocation4 + $0x38] sm:$0xf]
    %v428 = vld [vmem:[#allocation4 + $0x3c] sm:$0xf]
    %v429 = vld [vmem:[#allocation4 + $0x40] sm:$0xf]
    %v430 = vld [vmem:[#allocation4 + $0x44] sm:$0xf]
    %v431 = vld [vmem:[#allocation4 + $0x48] sm:$0xf]
    %v432 = vld [vmem:[#allocation4 + $0x4c] sm:$0xf]
    %v433 = vld [vmem:[#allocation4 + $0x50] sm:$0xf]
    %v434 = vld [vmem:[#allocation4 + $0x54] sm:$0xf]
    %v435 = vld [vmem:[#allocation4 + $0x58] sm:$0xf]
    %v436 = vld [vmem:[#allocation4 + $0x5c] sm:$0xf]
    %v437 = vld [vmem:[#allocation4 + $0x60] sm:$0xf]
    %v438 = vld [vmem:[#allocation4 + $0x64] sm:$0xf]
    %v439 = vld [vmem:[#allocation4 + $0x68] sm:$0xf]
    %v440 = vld [vmem:[#allocation4 + $0x6c] sm:$0xf]
    %v441 = vld [vmem:[#allocation4 + $0x70] sm:$0xf]
    %v442 = vld [vmem:[#allocation4 + $0x74] sm:$0xf]
    %v443 = vld [vmem:[#allocation4 + $0x78] sm:$0xf]
    %v444 = vld [vmem:[#allocation4 + $0x7c] sm:$0xf]
    %v445 = vld [vmem:[#allocation4 + $0x80] sm:$0xf]
    %v446 = vld [vmem:[#allocation4 + $0x84] sm:$0xf]
    %v447 = vld [vmem:[#allocation4 + $0x88] sm:$0xf]
    %v448 = vld [vmem:[#allocation4 + $0x8c] sm:$0xf]
    %v449 = vld [vmem:[#allocation4 + $0x90] sm:$0xf]
    %v450 = vld [vmem:[#allocation4 + $0x94] sm:$0xf]
    %v451 = vld [vmem:[#allocation4 + $0x98] sm:$0xf]
    %v452 = vld [vmem:[#allocation4 + $0x9c] sm:$0xf]
    %v453 = vld [vmem:[#allocation4 + $0xa0] sm:$0xf]
    %v454 = vld [vmem:[#allocation4 + $0xa4] sm:$0xf]
    %v455 = vld [vmem:[#allocation4 + $0xa8] sm:$0xf]
    %v456 = vld [vmem:[#allocation4 + $0xac] sm:$0xf]
    %v457 = vld [vmem:[#allocation4 + $0xb0] sm:$0xf]
    %v458 = vld [vmem:[#allocation4 + $0xb4] sm:$0xf]
    %v459 = vld [vmem:[#allocation4 + $0xb8] sm:$0xf]
    %v460 = vld [vmem:[#allocation4 + $0xbc] sm:$0xf]
    %v461 = vld [vmem:[#allocation4 + $0xc0] sm:$0xf]
    %v462 = vld [vmem:[#allocation4 + $0xc4] sm:$0xf]
    %v463 = vld [vmem:[#allocation4 + $0xc8] sm:$0xf]
    %v464 = vld [vmem:[#allocation4 + $0xcc] sm:$0xf]
    %v465 = vld [vmem:[#allocation4 + $0xd0] sm:$0xf]
    %v466 = vld [vmem:[#allocation4 + $0xd4] sm:$0xf]
    %v467 = vld [vmem:[#allocation4 + $0xd8] sm:$0xf]
    %v468 = vld [vmem:[#allocation4 + $0xdc] sm:$0xf]
    %v469 = vld [vmem:[#allocation4 + $0xe0] sm:$0xf]
    %v470 = vld [vmem:[#allocation4 + $0xe4] sm:$0xf]
    %v471 = vld [vmem:[#allocation4 + $0xe8] sm:$0xf]
    %v472 = vld [vmem:[#allocation4 + $0xec] sm:$0xf]
    %v473 = vld [vmem:[#allocation4 + $0xf0] sm:$0xf]
    %v474 = vld [vmem:[#allocation4 + $0xf4] sm:$0xf]
    %v475 = vld [vmem:[#allocation4 + $0xf8] sm:$0xf]
    %v476 = vld [vmem:[#allocation4 + $0xfc] sm:$0xf]
    %v477 = vld [vmem:[%s4] sm:$0x1]
    %v479 = vlaneseq
    %v480 = vshrl.u32 %v479, 7
    %v481 = vsub.s32 0, %v480
    %v482 = vrot.slane %v477, %v481
    %v548 = vunpack.c.l.b16 %v413
    %v549 = vunpack.c.l.b16 %v414
    %v550 = vunpack.c.l.b16 %v415
    %v551 = vunpack.c.l.b16 %v416
    %v552 = vunpack.c.l.b16 %v417
    %v553 = vunpack.c.l.b16 %v418
    %v554 = vunpack.c.l.b16 %v419
    %v555 = vunpack.c.l.b16 %v420
    %v556 = vunpack.c.l.b16 %v421
    %v557 = vunpack.c.l.b16 %v422
    %v558 = vunpack.c.l.b16 %v423
    %v559 = vunpack.c.l.b16 %v424
    %v560 = vunpack.c.l.b16 %v425
    %v561 = vunpack.c.l.b16 %v426
    %v562 = vunpack.c.l.b16 %v427
    %v563 = vunpack.c.l.b16 %v428
    %v564 = vunpack.c.l.b16 %v429
    %v565 = vunpack.c.l.b16 %v430
    %v566 = vunpack.c.l.b16 %v431
    %v567 = vunpack.c.l.b16 %v432
    %v568 = vunpack.c.l.b16 %v433
    %v569 = vunpack.c.l.b16 %v434
    %v570 = vunpack.c.l.b16 %v435
    %v571 = vunpack.c.l.b16 %v436
    %v572 = vunpack.c.l.b16 %v437
    %v573 = vunpack.c.l.b16 %v438
    %v574 = vunpack.c.l.b16 %v439
    %v575 = vunpack.c.l.b16 %v440
    %v576 = vunpack.c.l.b16 %v441
    %v577 = vunpack.c.l.b16 %v442
    %v578 = vunpack.c.l.b16 %v443
    %v579 = vunpack.c.l.b16 %v444
    %v580 = vunpack.c.l.b16 %v445
    %v581 = vunpack.c.l.b16 %v446
    %v582 = vunpack.c.l.b16 %v447
    %v583 = vunpack.c.l.b16 %v448
    %v584 = vunpack.c.l.b16 %v449
    %v585 = vunpack.c.l.b16 %v450
    %v586 = vunpack.c.l.b16 %v451
    %v587 = vunpack.c.l.b16 %v452
    %v588 = vunpack.c.l.b16 %v453
    %v589 = vunpack.c.l.b16 %v454
    %v590 = vunpack.c.l.b16 %v455
    %v591 = vunpack.c.l.b16 %v456
    %v592 = vunpack.c.l.b16 %v457
    %v593 = vunpack.c.l.b16 %v458
    %v594 = vunpack.c.l.b16 %v459
    %v595 = vunpack.c.l.b16 %v460
    %v596 = vunpack.c.l.b16 %v461
    %v597 = vunpack.c.l.b16 %v462
    %v598 = vunpack.c.l.b16 %v463
    %v599 = vunpack.c.l.b16 %v464
    %v600 = vunpack.c.l.b16 %v465
    %v601 = vunpack.c.l.b16 %v466
    %v602 = vunpack.c.l.b16 %v467
    %v603 = vunpack.c.l.b16 %v468
    %v604 = vunpack.c.l.b16 %v469
    %v605 = vunpack.c.l.b16 %v470
    %v606 = vunpack.c.l.b16 %v471
    %v607 = vunpack.c.l.b16 %v472
    %v608 = vunpack.c.l.b16 %v473
    %v609 = vunpack.c.l.b16 %v474
    %v610 = vunpack.c.l.b16 %v475
    %v611 = vunpack.c.l.b16 %v476
    %v612 = vpack.c.b16 %v549, %v548
    %v613 = vpack.c.b16 %v551, %v550
    %v614 = vpack.c.b16 %v553, %v552
    %v615 = vpack.c.b16 %v555, %v554
    %v616 = vpack.c.b16 %v557, %v556
    %v617 = vpack.c.b16 %v559, %v558
    %v618 = vpack.c.b16 %v561, %v560
    %v619 = vpack.c.b16 %v563, %v562
    %v620 = vpack.c.b16 %v565, %v564
    %v621 = vpack.c.b16 %v567, %v566
    %v622 = vpack.c.b16 %v569, %v568
    %v623 = vpack.c.b16 %v571, %v570
    %v624 = vpack.c.b16 %v573, %v572
    %v625 = vpack.c.b16 %v575, %v574
    %v626 = vpack.c.b16 %v577, %v576
    %v627 = vpack.c.b16 %v579, %v578
    %v628 = vpack.c.b16 %v581, %v580
    %v629 = vpack.c.b16 %v583, %v582
    %v630 = vpack.c.b16 %v585, %v584
    %v631 = vpack.c.b16 %v587, %v586
    %v632 = vpack.c.b16 %v589, %v588
    %v633 = vpack.c.b16 %v591, %v590
    %v634 = vpack.c.b16 %v593, %v592
    %v635 = vpack.c.b16 %v595, %v594
    %v636 = vpack.c.b16 %v597, %v596
    %v637 = vpack.c.b16 %v599, %v598
    %v638 = vpack.c.b16 %v601, %v600
    %v639 = vpack.c.b16 %v603, %v602
    %v640 = vpack.c.b16 %v605, %v604
    %v641 = vpack.c.b16 %v607, %v606
    %v642 = vpack.c.b16 %v609, %v608
    %v643 = vpack.c.b16 %v611, %v610
    %676 = vmatprep.subr.bf16.mxu0 0
    %677 = vmatpush1.bf16.msra.mxu0 %v612
    %678 = vmatprep.subr.bf16.mxu0 0
    %679 = vmatpush1.bf16.msra.mxu0 %v613
    %680 = vmatprep.subr.bf16.mxu0 0
    %681 = vmatpush1.bf16.msra.mxu0 %v614
    %682 = vmatprep.subr.bf16.mxu0 0
    %683 = vmatpush1.bf16.msra.mxu0 %v615
    %684 = vmatprep.subr.bf16.mxu0 0
    %685 = vmatpush1.bf16.msra.mxu0 %v616
    %686 = vmatprep.subr.bf16.mxu0 0
    %687 = vmatpush1.bf16.msra.mxu0 %v617
    %688 = vmatprep.subr.bf16.mxu0 0
    %689 = vmatpush1.bf16.msra.mxu0 %v618
    %690 = vmatprep.subr.bf16.mxu0 0
    %691 = vmatpush1.bf16.msra.mxu0 %v619
    %692 = vmatprep.subr.bf16.mxu0 0
    %693 = vmatpush1.bf16.msra.mxu0 %v620
    %694 = vmatprep.subr.bf16.mxu0 0
    %695 = vmatpush1.bf16.msra.mxu0 %v621
    %696 = vmatprep.subr.bf16.mxu0 0
    %697 = vmatpush1.bf16.msra.mxu0 %v622
    %698 = vmatprep.subr.bf16.mxu0 0
    %699 = vmatpush1.bf16.msra.mxu0 %v623
    %700 = vmatprep.subr.bf16.mxu0 0
    %701 = vmatpush1.bf16.msra.mxu0 %v624
    %702 = vmatprep.subr.bf16.mxu0 0
    %703 = vmatpush1.bf16.msra.mxu0 %v625
    %704 = vmatprep.subr.bf16.mxu0 0
    %705 = vmatpush1.bf16.msra.mxu0 %v626
    %706 = vmatprep.subr.bf16.mxu0 0
    %707 = vmatpush1.bf16.msra.mxu0 %v627
    %708 = vmatprep.mubr.bf16.mxu0 %v410
    %709 = vmatmul.mubr.bf16.gmra.mrb[0].mxu0 %v409
    %v710 = vpop.f32.mrb[0].mxu0
    %v711 = vadd.f32 %v482, %v710
    %v712 = vpop.f32.mrb[0].mxu0
    %v713 = vpop.f32.mrb[0].mxu0
    %v714 = vadd.f32 %v482, %v713
    %v715 = vpop.f32.mrb[0].mxu0
    %716 = vdwg.mxu0
    %717 = vmatprep.subr.bf16.mxu0 0
    %718 = vmatpush1.bf16.msra.mxu0 %v628
    %719 = vmatprep.subr.bf16.mxu0 0
    %720 = vmatpush1.bf16.msra.mxu0 %v629
    %721 = vmatprep.subr.bf16.mxu0 0
    %722 = vmatpush1.bf16.msra.mxu0 %v630
    %723 = vmatprep.subr.bf16.mxu0 0
    %724 = vmatpush1.bf16.msra.mxu0 %v631
    %725 = vmatprep.subr.bf16.mxu0 0
    %726 = vmatpush1.bf16.msra.mxu0 %v632
    %727 = vmatprep.subr.bf16.mxu0 0
    %728 = vmatpush1.bf16.msra.mxu0 %v633
    %729 = vmatprep.subr.bf16.mxu0 0
    %730 = vmatpush1.bf16.msra.mxu0 %v634
    %731 = vmatprep.subr.bf16.mxu0 0
    %732 = vmatpush1.bf16.msra.mxu0 %v635
    %733 = vmatprep.subr.bf16.mxu0 0
    %734 = vmatpush1.bf16.msra.mxu0 %v636
    %735 = vmatprep.subr.bf16.mxu0 0
    %736 = vmatpush1.bf16.msra.mxu0 %v637
    %737 = vmatprep.subr.bf16.mxu0 0
    %738 = vmatpush1.bf16.msra.mxu0 %v638
    %739 = vmatprep.subr.bf16.mxu0 0
    %740 = vmatpush1.bf16.msra.mxu0 %v639
    %741 = vmatprep.subr.bf16.mxu0 0
    %742 = vmatpush1.bf16.msra.mxu0 %v640
    %743 = vmatprep.subr.bf16.mxu0 0
    %744 = vmatpush1.bf16.msra.mxu0 %v641
    %745 = vmatprep.subr.bf16.mxu0 0
    %746 = vmatpush1.bf16.msra.mxu0 %v642
    %747 = vmatprep.subr.bf16.mxu0 0
    %748 = vmatpush1.bf16.msra.mxu0 %v643
    %749 = vmatprep.mubr.bf16.mxu0 %v412
    %750 = vmatmul.mubr.bf16.gmra.mrb[0].mxu0 %v411
    %v751 = vpop.f32.mrb[0].mxu0
    %v752 = vadd.f32 %v711, %v751
    %v753 = vpop.f32.mrb[0].mxu0
    %v754 = vpop.f32.mrb[0].mxu0
    %v755 = vadd.f32 %v714, %v754
    %v756 = vpop.f32.mrb[0].mxu0
    %757 = vdwg.mxu0
    %v758 = vtanh.pop %v752
    %v759 = vtanh.pop %v755
    %v760 = vld [vmem:[%s9] sm:$0x1]
    %v762 = vlaneseq
    %v763 = vshrl.u32 %v762, 7
    %v764 = vsub.s32 0, %v763
    %v765 = vrot.slane %v760, %v764
    %v767 = vadd.f32 %v758, %v765
    %v768 = vadd.f32 %v759, %v765
    %769 = vst [vmem:[%s11] sm:$0xff] %v767
    %770 = vst [vmem:[%s11 + $0x8] sm:$0xff] %v768
    %v771 = vpack.c.bf16 %v768, %v767
    %v772 = vld [vmem:[#allocation6] sm:$0xff]
    %v773 = vld [vmem:[#allocation6 + $0x8] sm:$0xff]
    %v774 = vld [vmem:[#allocation6 + $0x10] sm:$0xff]
    %v775 = vld [vmem:[#allocation6 + $0x18] sm:$0xff]
    %v776 = vld [vmem:[#allocation6 + $0x20] sm:$0xff]
    %v777 = vld [vmem:[#allocation6 + $0x28] sm:$0xff]
    %v778 = vld [vmem:[#allocation6 + $0x30] sm:$0xff]
    %v779 = vld [vmem:[#allocation6 + $0x38] sm:$0xff]
    %v780 = vld [vmem:[#allocation6 + $0x40] sm:$0xff]
    %v781 = vld [vmem:[#allocation6 + $0x48] sm:$0xff]
    %v782 = vld [vmem:[#allocation6 + $0x50] sm:$0xff]
    %v783 = vld [vmem:[#allocation6 + $0x58] sm:$0xff]
    %v784 = vld [vmem:[#allocation6 + $0x60] sm:$0xff]
    %v785 = vld [vmem:[#allocation6 + $0x68] sm:$0xff]
    %v786 = vld [vmem:[#allocation6 + $0x70] sm:$0xff]
    %v787 = vld [vmem:[#allocation6 + $0x78] sm:$0xff]
    %v788 = vld [vmem:[#allocation6 + $0x80] sm:$0xff]
    %v789 = vld [vmem:[#allocation6 + $0x88] sm:$0xff]
    %v790 = vld [vmem:[#allocation6 + $0x90] sm:$0xff]
    %v791 = vld [vmem:[#allocation6 + $0x98] sm:$0xff]
    %v792 = vld [vmem:[#allocation6 + $0xa0] sm:$0xff]
    %v793 = vld [vmem:[#allocation6 + $0xa8] sm:$0xff]
    %v794 = vld [vmem:[#allocation6 + $0xb0] sm:$0xff]
    %v795 = vld [vmem:[#allocation6 + $0xb8] sm:$0xff]
    %v796 = vld [vmem:[#allocation6 + $0xc0] sm:$0xff]
    %v797 = vld [vmem:[#allocation6 + $0xc8] sm:$0xff]
    %v798 = vld [vmem:[#allocation6 + $0xd0] sm:$0xff]
    %v799 = vld [vmem:[#allocation6 + $0xd8] sm:$0xff]
    %v800 = vld [vmem:[#allocation6 + $0xe0] sm:$0xff]
    %v801 = vld [vmem:[#allocation6 + $0xe8] sm:$0xff]
    %v802 = vld [vmem:[#allocation6 + $0xf0] sm:$0xff]
    %v803 = vld [vmem:[#allocation6 + $0xf8] sm:$0xff]
    %v804 = vld [vmem:[%s6] sm:$0xf]
    %v806 = vlaneseq
    %v807 = vshrl.u32 %v806, 7
    %v808 = vsub.s32 0, %v807
    %v809 = vrot.slane %v804, %v808
    %v810 = vlaneseq
    %v811 = vshrl.u32 %v810, 7
    %v812 = vsub.s32 1, %v811
    %v813 = vrot.slane %v804, %v812
    %v814 = vlaneseq
    %v815 = vshrl.u32 %v814, 7
    %v816 = vsub.s32 2, %v815
    %v817 = vrot.slane %v804, %v816
    %v818 = vlaneseq
    %v819 = vshrl.u32 %v818, 7
    %v820 = vsub.s32 3, %v819
    %v821 = vrot.slane %v804, %v820
    %v858 = vunpack.c.l.b16 %v772
    %v859 = vunpack.c.h.b16 %v772
    %v860 = vunpack.c.l.b16 %v773
    %v861 = vunpack.c.h.b16 %v773
    %v862 = vunpack.c.l.b16 %v774
    %v863 = vunpack.c.h.b16 %v774
    %v864 = vunpack.c.l.b16 %v775
    %v865 = vunpack.c.h.b16 %v775
    %v866 = vunpack.c.l.b16 %v776
    %v867 = vunpack.c.h.b16 %v776
    %v868 = vunpack.c.l.b16 %v777
    %v869 = vunpack.c.h.b16 %v777
    %v870 = vunpack.c.l.b16 %v778
    %v871 = vunpack.c.h.b16 %v778
    %v872 = vunpack.c.l.b16 %v779
    %v873 = vunpack.c.h.b16 %v779
    %v874 = vunpack.c.l.b16 %v780
    %v875 = vunpack.c.h.b16 %v780
    %v876 = vunpack.c.l.b16 %v781
    %v877 = vunpack.c.h.b16 %v781
    %v878 = vunpack.c.l.b16 %v782
    %v879 = vunpack.c.h.b16 %v782
    %v880 = vunpack.c.l.b16 %v783
    %v881 = vunpack.c.h.b16 %v783
    %v882 = vunpack.c.l.b16 %v784
    %v883 = vunpack.c.h.b16 %v784
    %v884 = vunpack.c.l.b16 %v785
    %v885 = vunpack.c.h.b16 %v785
    %v886 = vunpack.c.l.b16 %v786
    %v887 = vunpack.c.h.b16 %v786
    %v888 = vunpack.c.l.b16 %v787
    %v889 = vunpack.c.h.b16 %v787
    %v890 = vunpack.c.l.b16 %v788
    %v891 = vunpack.c.h.b16 %v788
    %v892 = vunpack.c.l.b16 %v789
    %v893 = vunpack.c.h.b16 %v789
    %v894 = vunpack.c.l.b16 %v790
    %v895 = vunpack.c.h.b16 %v790
    %v896 = vunpack.c.l.b16 %v791
    %v897 = vunpack.c.h.b16 %v791
    %v898 = vunpack.c.l.b16 %v792
    %v899 = vunpack.c.h.b16 %v792
    %v900 = vunpack.c.l.b16 %v793
    %v901 = vunpack.c.h.b16 %v793
    %v902 = vunpack.c.l.b16 %v794
    %v903 = vunpack.c.h.b16 %v794
    %v904 = vunpack.c.l.b16 %v795
    %v905 = vunpack.c.h.b16 %v795
    %v906 = vunpack.c.l.b16 %v796
    %v907 = vunpack.c.h.b16 %v796
    %v908 = vunpack.c.l.b16 %v797
    %v909 = vunpack.c.h.b16 %v797
    %v910 = vunpack.c.l.b16 %v798
    %v911 = vunpack.c.h.b16 %v798
    %v912 = vunpack.c.l.b16 %v799
    %v913 = vunpack.c.h.b16 %v799
    %v914 = vunpack.c.l.b16 %v800
    %v915 = vunpack.c.h.b16 %v800
    %v916 = vunpack.c.l.b16 %v801
    %v917 = vunpack.c.h.b16 %v801
    %v918 = vunpack.c.l.b16 %v802
    %v919 = vunpack.c.h.b16 %v802
    %v920 = vunpack.c.l.b16 %v803
    %v921 = vunpack.c.h.b16 %v803
    %v922 = vpack.c.b16 %v862, %v858
    %v923 = vpack.c.b16 %v863, %v859
    %v924 = vpack.c.b16 %v864, %v860
    %v925 = vpack.c.b16 %v865, %v861
    %v926 = vpack.c.b16 %v870, %v866
    %v927 = vpack.c.b16 %v871, %v867
    %v928 = vpack.c.b16 %v872, %v868
    %v929 = vpack.c.b16 %v873, %v869
    %v930 = vpack.c.b16 %v878, %v874
    %v931 = vpack.c.b16 %v879, %v875
    %v932 = vpack.c.b16 %v880, %v876
    %v933 = vpack.c.b16 %v881, %v877
    %v934 = vpack.c.b16 %v886, %v882
    %v935 = vpack.c.b16 %v887, %v883
    %v936 = vpack.c.b16 %v888, %v884
    %v937 = vpack.c.b16 %v889, %v885
    %v938 = vpack.c.b16 %v894, %v890
    %v939 = vpack.c.b16 %v895, %v891
    %v940 = vpack.c.b16 %v896, %v892
    %v941 = vpack.c.b16 %v897, %v893
    %v942 = vpack.c.b16 %v902, %v898
    %v943 = vpack.c.b16 %v903, %v899
    %v944 = vpack.c.b16 %v904, %v900
    %v945 = vpack.c.b16 %v905, %v901
    %v946 = vpack.c.b16 %v910, %v906
    %v947 = vpack.c.b16 %v911, %v907
    %v948 = vpack.c.b16 %v912, %v908
    %v949 = vpack.c.b16 %v913, %v909
    %v950 = vpack.c.b16 %v918, %v914
    %v951 = vpack.c.b16 %v919, %v915
    %v952 = vpack.c.b16 %v920, %v916
    %v953 = vpack.c.b16 %v921, %v917
    %986 = vmatprep.subr.bf16.mxu0 %v923
    %987 = vmatpush1.bf16.msra.mxu0 %v922
    %988 = vmatprep.subr.bf16.mxu0 %v927
    %989 = vmatpush1.bf16.msra.mxu0 %v926
    %990 = vmatprep.subr.bf16.mxu0 %v931
    %991 = vmatpush1.bf16.msra.mxu0 %v930
    %992 = vmatprep.subr.bf16.mxu0 %v935
    %993 = vmatpush1.bf16.msra.mxu0 %v934
    %994 = vmatprep.subr.bf16.mxu0 %v939
    %995 = vmatpush1.bf16.msra.mxu0 %v938
    %996 = vmatprep.subr.bf16.mxu0 %v943
    %997 = vmatpush1.bf16.msra.mxu0 %v942
    %998 = vmatprep.subr.bf16.mxu0 %v947
    %999 = vmatpush1.bf16.msra.mxu0 %v946
    %1000 = vmatprep.subr.bf16.mxu0 %v951
    %1001 = vmatpush1.bf16.msra.mxu0 %v950
    %1002 = vmatprep.subr.bf16.mxu0 0
    %1003 = vmatpush1.bf16.msra.mxu0 0
    %1004 = vmatprep.subr.bf16.mxu0 0
    %1005 = vmatpush1.bf16.msra.mxu0 0
    %1006 = vmatprep.subr.bf16.mxu0 0
    %1007 = vmatpush1.bf16.msra.mxu0 0
    %1008 = vmatprep.subr.bf16.mxu0 0
    %1009 = vmatpush1.bf16.msra.mxu0 0
    %1010 = vmatprep.subr.bf16.mxu0 0
    %1011 = vmatpush1.bf16.msra.mxu0 0
    %1012 = vmatprep.subr.bf16.mxu0 0
    %1013 = vmatpush1.bf16.msra.mxu0 0
    %1014 = vmatprep.subr.bf16.mxu0 0
    %1015 = vmatpush1.bf16.msra.mxu0 0
    %1016 = vmatprep.subr.bf16.mxu0 0
    %1017 = vmatpush1.bf16.msra.mxu0 0
    %1018 = vmatprep.mubr.bf16.mxu0 0
    %1019 = vmatmul.mubr.bf16.gmra.mrb[0].mxu0 %v771
    %v1020 = vpop.f32.mrb[0].mxu0
    %v1021 = vadd.f32 %v809, %v1020
    %v1022 = vpop.f32.mrb[0].mxu0
    %v1023 = vadd.f32 %v813, %v1022
    %v1024 = vpop.f32.mrb[0].mxu0
    %v1025 = vadd.f32 %v809, %v1024
    %v1026 = vpop.f32.mrb[0].mxu0
    %v1027 = vadd.f32 %v813, %v1026
    %1028 = vdwg.mxu0
    %1029 = vmatprep.subr.bf16.mxu0 %v925
    %1030 = vmatpush1.bf16.msra.mxu0 %v924
    %1031 = vmatprep.subr.bf16.mxu0 %v929
    %1032 = vmatpush1.bf16.msra.mxu0 %v928
    %1033 = vmatprep.subr.bf16.mxu0 %v933
    %1034 = vmatpush1.bf16.msra.mxu0 %v932
    %1035 = vmatprep.subr.bf16.mxu0 %v937
    %1036 = vmatpush1.bf16.msra.mxu0 %v936
    %1037 = vmatprep.subr.bf16.mxu0 %v941
    %1038 = vmatpush1.bf16.msra.mxu0 %v940
    %1039 = vmatprep.subr.bf16.mxu0 %v945
    %1040 = vmatpush1.bf16.msra.mxu0 %v944
    %1041 = vmatprep.subr.bf16.mxu0 %v949
    %1042 = vmatpush1.bf16.msra.mxu0 %v948
    %1043 = vmatprep.subr.bf16.mxu0 %v953
    %1044 = vmatpush1.bf16.msra.mxu0 %v952
    %1045 = vmatprep.subr.bf16.mxu0 0
    %1046 = vmatpush1.bf16.msra.mxu0 0
    %1047 = vmatprep.subr.bf16.mxu0 0
    %1048 = vmatpush1.bf16.msra.mxu0 0
    %1049 = vmatprep.subr.bf16.mxu0 0
    %1050 = vmatpush1.bf16.msra.mxu0 0
    %1051 = vmatprep.subr.bf16.mxu0 0
    %1052 = vmatpush1.bf16.msra.mxu0 0
    %1053 = vmatprep.subr.bf16.mxu0 0
    %1054 = vmatpush1.bf16.msra.mxu0 0
    %1055 = vmatprep.subr.bf16.mxu0 0
    %1056 = vmatpush1.bf16.msra.mxu0 0
    %1057 = vmatprep.subr.bf16.mxu0 0
    %1058 = vmatpush1.bf16.msra.mxu0 0
    %1059 = vmatprep.subr.bf16.mxu0 0
    %1060 = vmatpush1.bf16.msra.mxu0 0
    %1061 = vmatprep.mubr.bf16.mxu0 0
    %1062 = vmatmul.mubr.bf16.gmra.mrb[0].mxu0 %v771
    %v1063 = vpop.f32.mrb[0].mxu0
    %v1064 = vadd.f32 %v817, %v1063
    %v1065 = vpop.f32.mrb[0].mxu0
    %v1066 = vadd.f32 %v821, %v1065
    %v1067 = vpop.f32.mrb[0].mxu0
    %v1068 = vadd.f32 %v817, %v1067
    %v1069 = vpop.f32.mrb[0].mxu0
    %v1070 = vadd.f32 %v821, %v1069
    %1071 = vdwg.mxu0
    %v1072 = vmax.f32 %v1021, 0.0
    %v1073 = vmax.f32 %v1023, 0.0
    %v1074 = vmax.f32 %v1064, 0.0
    %v1075 = vmax.f32 %v1066, 0.0
    %v1076 = vmax.f32 %v1025, 0.0
    %v1077 = vmax.f32 %v1027, 0.0
    %v1078 = vmax.f32 %v1068, 0.0
    %v1079 = vmax.f32 %v1070, 0.0
    %v1080 = vpack.c.bf16 %v1076, %v1072
    %v1081 = vpack.c.bf16 %v1077, %v1073
    %v1082 = vpack.c.bf16 %v1078, %v1074
    %v1083 = vpack.c.bf16 %v1079, %v1075
    %v1084 = vld [vmem:[#allocation7] sm:$0xf]
    %v1085 = vld [vmem:[#allocation7 + $0x4] sm:$0xf]
    %v1086 = vld [vmem:[#allocation7 + $0x8] sm:$0xf]
    %v1087 = vld [vmem:[#allocation7 + $0xc] sm:$0xf]
    %v1088 = vld [vmem:[#allocation7 + $0x10] sm:$0xf]
    %v1089 = vld [vmem:[#allocation7 + $0x14] sm:$0xf]
    %v1090 = vld [vmem:[#allocation7 + $0x18] sm:$0xf]
    %v1091 = vld [vmem:[#allocation7 + $0x1c] sm:$0xf]
    %v1092 = vld [vmem:[#allocation7 + $0x20] sm:$0xf]
    %v1093 = vld [vmem:[#allocation7 + $0x24] sm:$0xf]
    %v1094 = vld [vmem:[#allocation7 + $0x28] sm:$0xf]
    %v1095 = vld [vmem:[#allocation7 + $0x2c] sm:$0xf]
    %v1096 = vld [vmem:[#allocation7 + $0x30] sm:$0xf]
    %v1097 = vld [vmem:[#allocation7 + $0x34] sm:$0xf]
    %v1098 = vld [vmem:[#allocation7 + $0x38] sm:$0xf]
    %v1099 = vld [vmem:[#allocation7 + $0x3c] sm:$0xf]
    %v1100 = vld [vmem:[#allocation7 + $0x40] sm:$0xf]
    %v1101 = vld [vmem:[#allocation7 + $0x44] sm:$0xf]
    %v1102 = vld [vmem:[#allocation7 + $0x48] sm:$0xf]
    %v1103 = vld [vmem:[#allocation7 + $0x4c] sm:$0xf]
    %v1104 = vld [vmem:[#allocation7 + $0x50] sm:$0xf]
    %v1105 = vld [vmem:[#allocation7 + $0x54] sm:$0xf]
    %v1106 = vld [vmem:[#allocation7 + $0x58] sm:$0xf]
    %v1107 = vld [vmem:[#allocation7 + $0x5c] sm:$0xf]
    %v1108 = vld [vmem:[#allocation7 + $0x60] sm:$0xf]
    %v1109 = vld [vmem:[#allocation7 + $0x64] sm:$0xf]
    %v1110 = vld [vmem:[#allocation7 + $0x68] sm:$0xf]
    %v1111 = vld [vmem:[#allocation7 + $0x6c] sm:$0xf]
    %v1112 = vld [vmem:[#allocation7 + $0x70] sm:$0xf]
    %v1113 = vld [vmem:[#allocation7 + $0x74] sm:$0xf]
    %v1114 = vld [vmem:[#allocation7 + $0x78] sm:$0xf]
    %v1115 = vld [vmem:[#allocation7 + $0x7c] sm:$0xf]
    %v1116 = vld [vmem:[#allocation7 + $0x80] sm:$0xf]
    %v1117 = vld [vmem:[#allocation7 + $0x84] sm:$0xf]
    %v1118 = vld [vmem:[#allocation7 + $0x88] sm:$0xf]
    %v1119 = vld [vmem:[#allocation7 + $0x8c] sm:$0xf]
    %v1120 = vld [vmem:[#allocation7 + $0x90] sm:$0xf]
    %v1121 = vld [vmem:[#allocation7 + $0x94] sm:$0xf]
    %v1122 = vld [vmem:[#allocation7 + $0x98] sm:$0xf]
    %v1123 = vld [vmem:[#allocation7 + $0x9c] sm:$0xf]
    %v1124 = vld [vmem:[#allocation7 + $0xa0] sm:$0xf]
    %v1125 = vld [vmem:[#allocation7 + $0xa4] sm:$0xf]
    %v1126 = vld [vmem:[#allocation7 + $0xa8] sm:$0xf]
    %v1127 = vld [vmem:[#allocation7 + $0xac] sm:$0xf]
    %v1128 = vld [vmem:[#allocation7 + $0xb0] sm:$0xf]
    %v1129 = vld [vmem:[#allocation7 + $0xb4] sm:$0xf]
    %v1130 = vld [vmem:[#allocation7 + $0xb8] sm:$0xf]
    %v1131 = vld [vmem:[#allocation7 + $0xbc] sm:$0xf]
    %v1132 = vld [vmem:[#allocation7 + $0xc0] sm:$0xf]
    %v1133 = vld [vmem:[#allocation7 + $0xc4] sm:$0xf]
    %v1134 = vld [vmem:[#allocation7 + $0xc8] sm:$0xf]
    %v1135 = vld [vmem:[#allocation7 + $0xcc] sm:$0xf]
    %v1136 = vld [vmem:[#allocation7 + $0xd0] sm:$0xf]
    %v1137 = vld [vmem:[#allocation7 + $0xd4] sm:$0xf]
    %v1138 = vld [vmem:[#allocation7 + $0xd8] sm:$0xf]
    %v1139 = vld [vmem:[#allocation7 + $0xdc] sm:$0xf]
    %v1140 = vld [vmem:[#allocation7 + $0xe0] sm:$0xf]
    %v1141 = vld [vmem:[#allocation7 + $0xe4] sm:$0xf]
    %v1142 = vld [vmem:[#allocation7 + $0xe8] sm:$0xf]
    %v1143 = vld [vmem:[#allocation7 + $0xec] sm:$0xf]
    %v1144 = vld [vmem:[#allocation7 + $0xf0] sm:$0xf]
    %v1145 = vld [vmem:[#allocation7 + $0xf4] sm:$0xf]
    %v1146 = vld [vmem:[#allocation7 + $0xf8] sm:$0xf]
    %v1147 = vld [vmem:[#allocation7 + $0xfc] sm:$0xf]
    %v1148 = vld [vmem:[%s8] sm:$0x1]
    %v1150 = vlaneseq
    %v1151 = vshrl.u32 %v1150, 7
    %v1152 = vsub.s32 0, %v1151
    %v1153 = vrot.slane %v1148, %v1152
    %v1219 = vunpack.c.l.b16 %v1084
    %v1220 = vunpack.c.l.b16 %v1085
    %v1221 = vunpack.c.l.b16 %v1086
    %v1222 = vunpack.c.l.b16 %v1087
    %v1223 = vunpack.c.l.b16 %v1088
    %v1224 = vunpack.c.l.b16 %v1089
    %v1225 = vunpack.c.l.b16 %v1090
    %v1226 = vunpack.c.l.b16 %v1091
    %v1227 = vunpack.c.l.b16 %v1092
    %v1228 = vunpack.c.l.b16 %v1093
    %v1229 = vunpack.c.l.b16 %v1094
    %v1230 = vunpack.c.l.b16 %v1095
    %v1231 = vunpack.c.l.b16 %v1096
    %v1232 = vunpack.c.l.b16 %v1097
    %v1233 = vunpack.c.l.b16 %v1098
    %v1234 = vunpack.c.l.b16 %v1099
    %v1235 = vunpack.c.l.b16 %v1100
    %v1236 = vunpack.c.l.b16 %v1101
    %v1237 = vunpack.c.l.b16 %v1102
    %v1238 = vunpack.c.l.b16 %v1103
    %v1239 = vunpack.c.l.b16 %v1104
    %v1240 = vunpack.c.l.b16 %v1105
    %v1241 = vunpack.c.l.b16 %v1106
    %v1242 = vunpack.c.l.b16 %v1107
    %v1243 = vunpack.c.l.b16 %v1108
    %v1244 = vunpack.c.l.b16 %v1109
    %v1245 = vunpack.c.l.b16 %v1110
    %v1246 = vunpack.c.l.b16 %v1111
    %v1247 = vunpack.c.l.b16 %v1112
    %v1248 = vunpack.c.l.b16 %v1113
    %v1249 = vunpack.c.l.b16 %v1114
    %v1250 = vunpack.c.l.b16 %v1115
    %v1251 = vunpack.c.l.b16 %v1116
    %v1252 = vunpack.c.l.b16 %v1117
    %v1253 = vunpack.c.l.b16 %v1118
    %v1254 = vunpack.c.l.b16 %v1119
    %v1255 = vunpack.c.l.b16 %v1120
    %v1256 = vunpack.c.l.b16 %v1121
    %v1257 = vunpack.c.l.b16 %v1122
    %v1258 = vunpack.c.l.b16 %v1123
    %v1259 = vunpack.c.l.b16 %v1124
    %v1260 = vunpack.c.l.b16 %v1125
    %v1261 = vunpack.c.l.b16 %v1126
    %v1262 = vunpack.c.l.b16 %v1127
    %v1263 = vunpack.c.l.b16 %v1128
    %v1264 = vunpack.c.l.b16 %v1129
    %v1265 = vunpack.c.l.b16 %v1130
    %v1266 = vunpack.c.l.b16 %v1131
    %v1267 = vunpack.c.l.b16 %v1132
    %v1268 = vunpack.c.l.b16 %v1133
    %v1269 = vunpack.c.l.b16 %v1134
    %v1270 = vunpack.c.l.b16 %v1135
    %v1271 = vunpack.c.l.b16 %v1136
    %v1272 = vunpack.c.l.b16 %v1137
    %v1273 = vunpack.c.l.b16 %v1138
    %v1274 = vunpack.c.l.b16 %v1139
    %v1275 = vunpack.c.l.b16 %v1140
    %v1276 = vunpack.c.l.b16 %v1141
    %v1277 = vunpack.c.l.b16 %v1142
    %v1278 = vunpack.c.l.b16 %v1143
    %v1279 = vunpack.c.l.b16 %v1144
    %v1280 = vunpack.c.l.b16 %v1145
    %v1281 = vunpack.c.l.b16 %v1146
    %v1282 = vunpack.c.l.b16 %v1147
    %v1283 = vpack.c.b16 %v1220, %v1219
    %v1284 = vpack.c.b16 %v1222, %v1221
    %v1285 = vpack.c.b16 %v1224, %v1223
    %v1286 = vpack.c.b16 %v1226, %v1225
    %v1287 = vpack.c.b16 %v1228, %v1227
    %v1288 = vpack.c.b16 %v1230, %v1229
    %v1289 = vpack.c.b16 %v1232, %v1231
    %v1290 = vpack.c.b16 %v1234, %v1233
    %v1291 = vpack.c.b16 %v1236, %v1235
    %v1292 = vpack.c.b16 %v1238, %v1237
    %v1293 = vpack.c.b16 %v1240, %v1239
    %v1294 = vpack.c.b16 %v1242, %v1241
    %v1295 = vpack.c.b16 %v1244, %v1243
    %v1296 = vpack.c.b16 %v1246, %v1245
    %v1297 = vpack.c.b16 %v1248, %v1247
    %v1298 = vpack.c.b16 %v1250, %v1249
    %v1299 = vpack.c.b16 %v1252, %v1251
    %v1300 = vpack.c.b16 %v1254, %v1253
    %v1301 = vpack.c.b16 %v1256, %v1255
    %v1302 = vpack.c.b16 %v1258, %v1257
    %v1303 = vpack.c.b16 %v1260, %v1259
    %v1304 = vpack.c.b16 %v1262, %v1261
    %v1305 = vpack.c.b16 %v1264, %v1263
    %v1306 = vpack.c.b16 %v1266, %v1265
    %v1307 = vpack.c.b16 %v1268, %v1267
    %v1308 = vpack.c.b16 %v1270, %v1269
    %v1309 = vpack.c.b16 %v1272, %v1271
    %v1310 = vpack.c.b16 %v1274, %v1273
    %v1311 = vpack.c.b16 %v1276, %v1275
    %v1312 = vpack.c.b16 %v1278, %v1277
    %v1313 = vpack.c.b16 %v1280, %v1279
    %v1314 = vpack.c.b16 %v1282, %v1281
    %1347 = vmatprep.subr.bf16.mxu0 0
    %1348 = vmatpush1.bf16.msra.mxu0 %v1283
    %1349 = vmatprep.subr.bf16.mxu0 0
    %1350 = vmatpush1.bf16.msra.mxu0 %v1284
    %1351 = vmatprep.subr.bf16.mxu0 0
    %1352 = vmatpush1.bf16.msra.mxu0 %v1285
    %1353 = vmatprep.subr.bf16.mxu0 0
    %1354 = vmatpush1.bf16.msra.mxu0 %v1286
    %1355 = vmatprep.subr.bf16.mxu0 0
    %1356 = vmatpush1.bf16.msra.mxu0 %v1287
    %1357 = vmatprep.subr.bf16.mxu0 0
    %1358 = vmatpush1.bf16.msra.mxu0 %v1288
    %1359 = vmatprep.subr.bf16.mxu0 0
    %1360 = vmatpush1.bf16.msra.mxu0 %v1289
    %1361 = vmatprep.subr.bf16.mxu0 0
    %1362 = vmatpush1.bf16.msra.mxu0 %v1290
    %1363 = vmatprep.subr.bf16.mxu0 0
    %1364 = vmatpush1.bf16.msra.mxu0 %v1291
    %1365 = vmatprep.subr.bf16.mxu0 0
    %1366 = vmatpush1.bf16.msra.mxu0 %v1292
    %1367 = vmatprep.subr.bf16.mxu0 0
    %1368 = vmatpush1.bf16.msra.mxu0 %v1293
    %1369 = vmatprep.subr.bf16.mxu0 0
    %1370 = vmatpush1.bf16.msra.mxu0 %v1294
    %1371 = vmatprep.subr.bf16.mxu0 0
    %1372 = vmatpush1.bf16.msra.mxu0 %v1295
    %1373 = vmatprep.subr.bf16.mxu0 0
    %1374 = vmatpush1.bf16.msra.mxu0 %v1296
    %1375 = vmatprep.subr.bf16.mxu0 0
    %1376 = vmatpush1.bf16.msra.mxu0 %v1297
    %1377 = vmatprep.subr.bf16.mxu0 0
    %1378 = vmatpush1.bf16.msra.mxu0 %v1298
    %1379 = vmatprep.mubr.bf16.mxu0 %v1081
    %1380 = vmatmul.mubr.bf16.gmra.mrb[0].mxu0 %v1080
    %v1381 = vpop.f32.mrb[0].mxu0
    %v1382 = vadd.f32 %v1153, %v1381
    %v1383 = vpop.f32.mrb[0].mxu0
    %v1384 = vpop.f32.mrb[0].mxu0
    %v1385 = vadd.f32 %v1153, %v1384
    %v1386 = vpop.f32.mrb[0].mxu0
    %1387 = vdwg.mxu0
    %1388 = vmatprep.subr.bf16.mxu0 0
    %1389 = vmatpush1.bf16.msra.mxu0 %v1299
    %1390 = vmatprep.subr.bf16.mxu0 0
    %1391 = vmatpush1.bf16.msra.mxu0 %v1300
    %1392 = vmatprep.subr.bf16.mxu0 0
    %1393 = vmatpush1.bf16.msra.mxu0 %v1301
    %1394 = vmatprep.subr.bf16.mxu0 0
    %1395 = vmatpush1.bf16.msra.mxu0 %v1302
    %1396 = vmatprep.subr.bf16.mxu0 0
    %1397 = vmatpush1.bf16.msra.mxu0 %v1303
    %1398 = vmatprep.subr.bf16.mxu0 0
    %1399 = vmatpush1.bf16.msra.mxu0 %v1304
    %1400 = vmatprep.subr.bf16.mxu0 0
    %1401 = vmatpush1.bf16.msra.mxu0 %v1305
    %1402 = vmatprep.subr.bf16.mxu0 0
    %1403 = vmatpush1.bf16.msra.mxu0 %v1306
    %1404 = vmatprep.subr.bf16.mxu0 0
    %1405 = vmatpush1.bf16.msra.mxu0 %v1307
    %1406 = vmatprep.subr.bf16.mxu0 0
    %1407 = vmatpush1.bf16.msra.mxu0 %v1308
    %1408 = vmatprep.subr.bf16.mxu0 0
    %1409 = vmatpush1.bf16.msra.mxu0 %v1309
    %1410 = vmatprep.subr.bf16.mxu0 0
    %1411 = vmatpush1.bf16.msra.mxu0 %v1310
    %1412 = vmatprep.subr.bf16.mxu0 0
    %1413 = vmatpush1.bf16.msra.mxu0 %v1311
    %1414 = vmatprep.subr.bf16.mxu0 0
    %1415 = vmatpush1.bf16.msra.mxu0 %v1312
    %1416 = vmatprep.subr.bf16.mxu0 0
    %1417 = vmatpush1.bf16.msra.mxu0 %v1313
    %1418 = vmatprep.subr.bf16.mxu0 0
    %1419 = vmatpush1.bf16.msra.mxu0 %v1314
    %1420 = vmatprep.mubr.bf16.mxu0 %v1083
    %1421 = vmatmul.mubr.bf16.gmra.mrb[0].mxu0 %v1082
    %v1422 = vpop.f32.mrb[0].mxu0
    %v1423 = vadd.f32 %v1382, %v1422
    %v1424 = vpop.f32.mrb[0].mxu0
    %v1425 = vpop.f32.mrb[0].mxu0
    %v1426 = vadd.f32 %v1385, %v1425
    %v1427 = vpop.f32.mrb[0].mxu0
    %1428 = vdwg.mxu0
    %1429 = vst [vmem:[%s10] sm:$0xff] %v1423
    %1430 = vst [vmem:[%s10 + $0x8] sm:$0xff] %v1426
    // Predicated region
    $region58: #{neural_network4_forward.1} parent=1 // pred_check
      _
    $region59: #{neural_network4_forward.1} parent=1 // pred_check_branch
      %1432 = sbr.rel (0) target = $region61
    $region60: #{neural_network4_forward.1} parent=1 // pred_region
      _
    $region61: #{neural_network4_forward.1} parent=1 // pred_fallthru
      _
    // Predicated region
    $region62: #{neural_network4_forward.1} parent=1 // pred_check
      _
    $region63: #{neural_network4_forward.1} parent=1 // pred_check_branch
      %1434 = sbr.rel (0) target = $region65
    $region64: #{neural_network4_forward.1} parent=1 // pred_region
      _
    $region65: #{neural_network4_forward.1} parent=1 // pred_fallthru
      _
    // Predicated region
    $region66: #{neural_network4_forward.1} parent=1 // pred_check
      _
    $region67: #{neural_network4_forward.1} parent=1 // pred_check_branch
      %1436 = sbr.rel (0) target = $region69
    $region68: #{neural_network4_forward.1} parent=1 // pred_region
      _
    $region69: #{neural_network4_forward.1} parent=1 // pred_fallthru
      _
    // Predicated region
    $region70: #{neural_network4_forward.1} parent=1 // pred_check
      _
    $region71: #{neural_network4_forward.1} parent=1 // pred_check_branch
      %1438 = sbr.rel (0) target = $region73
    $region72: #{neural_network4_forward.1} parent=1 // pred_region
      _
    $region73: #{neural_network4_forward.1} parent=1 // pred_fallthru
      _
    %1439 = vsyncpa [#allocation3], 1
    %1440 = vsyncpa [#allocation5], 1
    %1441 = vsyncpa [#allocation8], 1

</llo_original>
